<compile_context>
chip_gen: v7x
topology: tpu7x:2x2x1
jax: 0.10.0
libtpu: 0.0.40
codegen_flags: <defaults>
</compile_context>

<pallas_src>
import functools

import jax
import jax.numpy as jnp
from jax.experimental import pallas as pl
from jax.experimental.pallas import tpu as pltpu

_LANE = 128
_SUBLANE = 8


def _critic_kernel(obs_ref, act_ref, p_ref, q_ref, *, dims, rows, use_bf16):
    """One batch tile: q[1, TB] = w3 @ relu(relu([obs|act]@w1+b1)@w2+b2)^T + b3."""
    obs_dim, act_dim, H1, H2 = dims
    r1o, r1a, r2, r3, rb = rows

    prec = jax.lax.Precision.DEFAULT if use_bf16 else jax.lax.Precision.HIGHEST
    cdt = jnp.bfloat16 if use_bf16 else jnp.float32

    # Static slices of the packed parameter block.  Row offsets are 8-aligned
    # and lane slices start at lane 0, so none of these cross an (8,128) tile
    # boundary (no hidden relayout copies); bias slices are sublane-indexed.
    w1o = p_ref[r1o:r1o + obs_dim, :H1].astype(cdt)    # [obs_dim, H1]
    w1a = p_ref[r1a:r1a + act_dim, :H1].astype(cdt)    # [act_dim, H1]
    w2 = p_ref[r2:r2 + H1, :H2].astype(cdt)            # [H1, H2]
    w3 = p_ref[r3:r3 + 1, :H2]                         # [1, H2] row (f32)
    b1 = p_ref[rb:rb + 1, :H1]                         # [1, H1]
    b2 = p_ref[rb + 1:rb + 2, :H2]                     # [1, H2]
    b3 = p_ref[rb + 2:rb + 3, :1]                      # [1, 1]

    obs = obs_ref[...].astype(cdt)                     # [TB, obs_dim]
    act = act_ref[...].astype(cdt)                     # [TB, act_dim]

    # Layer 1: fused concat(obs, act) @ w1 as two partial matmuls (no concat,
    # no extra HBM materialization of the concatenated input).
    h1 = (jnp.dot(obs, w1o, preferred_element_type=jnp.float32, precision=prec)
          + jnp.dot(act, w1a, preferred_element_type=jnp.float32, precision=prec)
          + b1)
    h1 = jnp.maximum(h1, 0.0)

    # Layer 2 (bias add + ReLU stay f32).
    h2 = jnp.dot(h1.astype(cdt), w2, preferred_element_type=jnp.float32,
                 precision=prec) + b2
    h2 = jnp.maximum(h2, 0.0)

    # Last layer (H2 -> 1), produced directly in the lane-dense [1, TB] layout:
    # contract w3's lane axis with h2's lane axis (q @ k^T-style dot_general).
    # f32 MXU accumulation; output store is an unmasked full-lane vst.
    q = jax.lax.dot_general(
        w3, h2, (((1,), (1,)), ((), ())),
        preferred_element_type=jnp.float32, precision=prec) + b3    # [1, TB]
    q_ref[...] = q.astype(q_ref.dtype)


def custom_critic_forward(obs, act, params, *, batch_tile=4096, use_bf16=False):
    """obs: [B, ...] f32, act: [B, act_dim] f32 -> Q: [B, 1] f32."""
    obs = obs.reshape(obs.shape[0], -1).astype(jnp.float32)
    act = act.astype(jnp.float32)
    B, obs_dim = obs.shape
    act_dim = act.shape[1]

    packed = params["packed"]
    dims, rows = params["dims"], params["rows"]
    assert dims[0] == obs_dim and dims[1] == act_dim
    ktot, hmax = packed.shape

    # ---- Batch tile selection --------------------------------------------
    #  * When the grid has >1 step, TB must be a multiple of 128 (the output
    #    block (1, TB) is lane-dense).
    #  * For B > 256 force >= 2 grid steps so the "parallel" batch axis can be
    #    split across v7x's two TensorCores.
    #  * Cap at batch_tile (default 4096) so the double-buffered, lane-padded
    #    activation stream stays well inside v7x's 64 MiB VMEM.
    if B <= 256:
        TB = B
    else:
        TB = max(_LANE, min(batch_tile, _LANE * pl.cdiv(pl.cdiv(B, 2), _LANE)))
    grid = (pl.cdiv(B, TB),)

    # Explicit VMEM budget (scoped defaults: 16 MiB v5e, 32 MiB v6e/v7x).
    f32b = 4
    est = (2 * 2 * TB * _LANE * f32b                  # obs+act tiles, 2 bufs, lane-padded
           + 2 * _SUBLANE * max(TB, _LANE) * f32b     # [1, TB] out tile, 2 bufs
           + 2 * ktot * max(hmax, _LANE) * f32b       # resident packed params
           + 4 * TB * _LANE * f32b)                   # h1 / h2 / transposed intermediates
    vmem_limit = int(min(max(2 * est, 32 * 2**20), 64 * 2**20))

    kernel = functools.partial(_critic_kernel, dims=dims, rows=rows,
                               use_bf16=use_bf16)

    q_row = pl.pallas_call(
        kernel,
        out_shape=jax.ShapeDtypeStruct((1, B), jnp.float32),
        grid=grid,
        in_specs=[
            pl.BlockSpec((TB, obs_dim), lambda i: (i, 0)),   # obs (streamed)
            pl.BlockSpec((TB, act_dim), lambda i: (i, 0)),   # act (streamed)
            # Packed params: single operand, VMEM-resident across grid steps.
            # TODO(synk): on v7x with wide hidden sizes, pipeline_mode=
            # pl.Buffered(1) here would drop the redundant second buffer.
            pl.BlockSpec((ktot, hmax), lambda i: (0, 0)),
        ],
        out_specs=pl.BlockSpec((1, TB), lambda i: (0, i)),   # lane-dense q row
        compiler_params=pltpu.CompilerParams(
            dimension_semantics=("parallel",),   # v7x: split batch over 2 TCs
            vmem_limit_bytes=vmem_limit,
        ),
    )(obs, act, packed)

    # Layout plumbing only: [1, B] row back to the module's [B, 1] column.
    return q_row.reshape(B, 1)


def init_params(key, in_dim, h1, h2):
    """Deterministic synthetic parameters (PyTorch-Linear-like uniform init),
    stored in the 'natural' (un-split, un-packed) layout used by the reference."""
    ks = jax.random.split(key, 6)

    def lin(kw, kb, fan_in, fan_out):
        bound = 1.0 / jnp.sqrt(jnp.float32(fan_in))
        w = jax.random.uniform(kw, (fan_in, fan_out), jnp.float32, -bound, bound)
        b = jax.random.uniform(kb, (1, fan_out), jnp.float32, -bound, bound)
        return w, b

    w1, b1 = lin(ks[0], ks[1], in_dim, h1)
    w2, b2 = lin(ks[2], ks[3], h1, h2)
    w3, b3 = lin(ks[4], ks[5], h2, 1)
    return {"w1": w1, "b1": b1, "w2": w2, "b2": b2, "w3": w3, "b3": b3}


def prepare_params(raw, obs_dim):
    """One-time layout plumbing: pack every parameter into a single
    sublane-stacked [K_total, max(H1,H2)] f32 block with 8-aligned row offsets."""
    w1, w2, w3 = raw["w1"], raw["w2"], raw["w3"]
    b1, b2, b3 = raw["b1"], raw["b2"], raw["b3"]
    in_dim, H1 = w1.shape
    H2 = w2.shape[1]
    act_dim = in_dim - obs_dim
    hmax = max(H1, H2)

    bias_blk = jnp.concatenate([
        jnp.pad(b1.reshape(1, H1), ((0, 0), (0, hmax - H1))),
        jnp.pad(b2.reshape(1, H2), ((0, 0), (0, hmax - H2))),
        jnp.pad(b3.reshape(1, 1), ((0, 0), (0, hmax - 1))),
    ], axis=0)                                   # [3, hmax]: rows b1 | b2 | b3

    blocks = [
        w1[:obs_dim],          # w1_obs  [obs_dim, H1]
        w1[obs_dim:],          # w1_act  [act_dim, H1]
        w2,                    # [H1, H2]
        w3.reshape(1, H2),     # w3 column -> [1, H2] row
        bias_blk,              # [3, hmax]
    ]

    padded, rows, off = [], [], 0
    for blk in blocks:
        r, c = blk.shape
        rp = -(-r // _SUBLANE) * _SUBLANE        # round rows up to a multiple of 8
        padded.append(jnp.pad(blk, ((0, rp - r), (0, hmax - c))))
        rows.append(off)
        off += rp

    return {
        "packed": jnp.concatenate(padded, axis=0).astype(jnp.float32),
        "rows": tuple(rows),
        "dims": (obs_dim, act_dim, H1, H2),
    }


def _reference(obs, act, raw):
    prec = jax.lax.Precision.HIGHEST
    x = jnp.concatenate([obs.reshape(obs.shape[0], -1), act], axis=-1)
    h1 = jnp.maximum(jnp.dot(x, raw["w1"], precision=prec) + raw["b1"], 0.0)
    h2 = jnp.maximum(jnp.dot(h1, raw["w2"], precision=prec) + raw["b2"], 0.0)
    return jnp.dot(h2, raw["w3"], precision=prec) + raw["b3"]


if __name__ == "__main__":
    key = jax.random.PRNGKey(0)
    k_obs, k_act, k_par, k_obs2, k_act2 = jax.random.split(key, 5)

    OBS_DIM, ACT_DIM = 16, 4                 # small demo shapes
    H1, H2 = 32, 32                          # preprocess hidden sizes
    # (If hidden widths are a free hyperparameter, 128/256 is effectively free
    # on TPU since 32-wide layers pad to 128 lanes in VMEM anyway.)

    raw_params = init_params(k_par, OBS_DIM + ACT_DIM, H1, H2)
    params = prepare_params(raw_params, OBS_DIM)

    # Case 1: tiny batch — single grid step, latency-bound path (3 DMAs total).
    B1 = 8
    obs1 = jax.random.normal(k_obs, (B1, OBS_DIM), jnp.float32)
    act1 = jax.random.normal(k_act, (B1, ACT_DIM), jnp.float32)
    q1 = jax.block_until_ready(custom_critic_forward(obs1, act1, params))
    q1_ref = _reference(obs1, act1, raw_params)
    assert q1.shape == (B1, 1)
    assert jnp.allclose(q1, q1_ref, atol=1e-5, rtol=1e-5)

    # Case 2: non-divisible batch -> TB=256, 2 grid steps; exercises the
    # partial last block and the masked lane-dense output writeback.
    B2 = 300
    obs2 = jax.random.normal(k_obs2, (B2, OBS_DIM), jnp.float32)
    act2 = jax.random.normal(k_act2, (B2, ACT_DIM), jnp.float32)
    q2 = jax.block_until_ready(custom_critic_forward(obs2, act2, params))
    q2_ref = _reference(obs2, act2, raw_params)
    assert q2.shape == (B2, 1)
    assert jnp.allclose(q2, q2_ref, atol=1e-5, rtol=1e-5)

    print("KERNEL_OK")
</pallas_src>

<mosaic_0001>
module attributes {stable_mosaic.version = 11 : i64} {
  func.func @_critic_kernel(%arg0: i32, %arg1: memref<8x16xf32, #tpu.memory_space<vmem>>, %arg2: memref<8x4xf32, #tpu.memory_space<vmem>>, %arg3: memref<72x32xf32, #tpu.memory_space<vmem>>, %arg4: memref<1x8xf32, #tpu.memory_space<vmem>>) attributes {dimension_semantics = [#tpu.dimension_semantics<parallel>], iteration_bounds = array<i64: 1>, scalar_prefetch = 0 : i64, scratch_operands = 0 : i64, tpu.core_type = #tpu.core_type<tc>, window_params = [{transform_indices = @transform_0, window_bounds = array<i64: 8, 16>}, {transform_indices = @transform_1, window_bounds = array<i64: 8, 4>}, {pipeline_mode = #tpu.pipeline_mode<synchronous>, transform_indices = @transform_2, window_bounds = array<i64: 72, 32>}, {transform_indices = @transform_3, window_bounds = array<i64: 1, 8>}]} {
    %c0 = arith.constant 0 : index
    %c0_0 = arith.constant 0 : index
    %0 = vector.load %arg3[%c0, %c0_0] : memref<72x32xf32, #tpu.memory_space<vmem>>, vector<16x32xf32>
    %c16 = arith.constant 16 : index
    %c0_1 = arith.constant 0 : index
    %1 = vector.load %arg3[%c16, %c0_1] : memref<72x32xf32, #tpu.memory_space<vmem>>, vector<4x32xf32>
    %c24 = arith.constant 24 : index
    %c0_2 = arith.constant 0 : index
    %2 = vector.load %arg3[%c24, %c0_2] : memref<72x32xf32, #tpu.memory_space<vmem>>, vector<32x32xf32>
    %c56 = arith.constant 56 : index
    %c0_3 = arith.constant 0 : index
    %3 = vector.load %arg3[%c56, %c0_3] : memref<72x32xf32, #tpu.memory_space<vmem>>, vector<1x32xf32>
    %c64 = arith.constant 64 : index
    %c0_4 = arith.constant 0 : index
    %4 = vector.load %arg3[%c64, %c0_4] : memref<72x32xf32, #tpu.memory_space<vmem>>, vector<1x32xf32>
    %c65 = arith.constant 65 : index
    %c0_5 = arith.constant 0 : index
    %5 = vector.load %arg3[%c65, %c0_5] : memref<72x32xf32, #tpu.memory_space<vmem>>, vector<1x32xf32>
    %c66 = arith.constant 66 : index
    %c0_6 = arith.constant 0 : index
    %6 = vector.load %arg3[%c66, %c0_6] : memref<72x32xf32, #tpu.memory_space<vmem>>, vector<1x1xf32>
    %c0_7 = arith.constant 0 : index
    %c0_8 = arith.constant 0 : index
    %7 = vector.load %arg1[%c0_7, %c0_8] : memref<8x16xf32, #tpu.memory_space<vmem>>, vector<8x16xf32>
    %c0_9 = arith.constant 0 : index
    %c0_10 = arith.constant 0 : index
    %8 = vector.load %arg2[%c0_9, %c0_10] : memref<8x4xf32, #tpu.memory_space<vmem>>, vector<8x4xf32>
    %cst = arith.constant dense<0.000000e+00> : vector<8x32xf32>
    %9 = tpu.matmul %7, %0, %cst {dimension_numbers = #tpu.dot_dimension_numbers<[1], [0], [0], [1], [0, 0, 1, 1], [], []>, precision = #tpu.contract_precision<fp32>} : vector<8x16xf32>, vector<16x32xf32>, vector<8x32xf32> -> vector<8x32xf32>
    %cst_11 = arith.constant dense<0.000000e+00> : vector<8x32xf32>
    %10 = tpu.matmul %8, %1, %cst_11 {dimension_numbers = #tpu.dot_dimension_numbers<[1], [0], [0], [1], [0, 0, 1, 1], [], []>, precision = #tpu.contract_precision<fp32>} : vector<8x4xf32>, vector<4x32xf32>, vector<8x32xf32> -> vector<8x32xf32>
    %11 = arith.addf %9, %10 : vector<8x32xf32>
    %12 = vector.broadcast %4 : vector<1x32xf32> to vector<8x32xf32>
    %13 = arith.addf %11, %12 : vector<8x32xf32>
    %cst_12 = arith.constant 0.000000e+00 : f32
    %14 = vector.broadcast %cst_12 : f32 to vector<8x32xf32>
    %15 = arith.maximumf %13, %14 : vector<8x32xf32>
    %cst_13 = arith.constant dense<0.000000e+00> : vector<8x32xf32>
    %16 = tpu.matmul %15, %2, %cst_13 {dimension_numbers = #tpu.dot_dimension_numbers<[1], [0], [0], [1], [0, 0, 1, 1], [], []>, precision = #tpu.contract_precision<fp32>} : vector<8x32xf32>, vector<32x32xf32>, vector<8x32xf32> -> vector<8x32xf32>
    %17 = vector.broadcast %5 : vector<1x32xf32> to vector<8x32xf32>
    %18 = arith.addf %16, %17 : vector<8x32xf32>
    %cst_14 = arith.constant 0.000000e+00 : f32
    %19 = vector.broadcast %cst_14 : f32 to vector<8x32xf32>
    %20 = arith.maximumf %18, %19 : vector<8x32xf32>
    %cst_15 = arith.constant dense<0.000000e+00> : vector<1x8xf32>
    %21 = tpu.matmul %3, %20, %cst_15 {dimension_numbers = #tpu.dot_dimension_numbers<[1], [1], [0], [0], [0, 0, 1, 0], [], []>, precision = #tpu.contract_precision<fp32>} : vector<1x32xf32>, vector<8x32xf32>, vector<1x8xf32> -> vector<1x8xf32>
    %22 = vector.broadcast %6 : vector<1x1xf32> to vector<1x8xf32>
    %23 = arith.addf %21, %22 : vector<1x8xf32>
    %c0_16 = arith.constant 0 : index
    %c0_17 = arith.constant 0 : index
    %24 = vector.load %arg4[%c0_16, %c0_17] : memref<1x8xf32, #tpu.memory_space<vmem>>, vector<1x8xf32>
    tpu.vector_store %arg4[%c0_16, %c0_17], %23 {strides = array<i32>} : memref<1x8xf32, #tpu.memory_space<vmem>>, vector<1x8xf32>,
    return
  }
  func.func @transform_0(%arg0: i32) -> (i32, i32) {
    %c0_i32 = arith.constant 0 : i32
    %c0_i32_0 = arith.constant 0 : i32
    return %arg0, %c0_i32 : i32, i32
  }
  func.func @transform_1(%arg0: i32) -> (i32, i32) {
    %c0_i32 = arith.constant 0 : i32
    %c0_i32_0 = arith.constant 0 : i32
    return %arg0, %c0_i32 : i32, i32
  }
  func.func @transform_2(%arg0: i32) -> (i32, i32) {
    %c0_i32 = arith.constant 0 : i32
    %c0_i32_0 = arith.constant 0 : i32
    %c0_i32_1 = arith.constant 0 : i32
    return %c0_i32, %c0_i32_0 : i32, i32
  }
  func.func @transform_3(%arg0: i32) -> (i32, i32) {
    %c0_i32 = arith.constant 0 : i32
    %c0_i32_0 = arith.constant 0 : i32
    return %c0_i32, %arg0 : i32, i32
  }
}

</mosaic_0001>

<llo_original>
// kernel: tpu_custom_call.1
$region0: #{tpu_custom_call.1}
  #allocation0 [shape = 'u32[]', space=smem, size = 0x4, offset = 0x4, fixed_abs, tag = 'smem constant byte address 0x4 - core index']
  #allocation1 [shape = 'u32[144,128]{1,0:T(1,128)}', space=vmem, size = 0x12000, scoped, tag = 'internal scratch']
  %s0 = inlined_call_operand.vmem [shape: f32[8,16], index: 0, kind: input, shape index: {}]
  %s1 = inlined_call_operand.vmem [shape: f32[8,4], index: 1, kind: input, shape index: {}]
  %s2 = inlined_call_operand.vmem [shape: f32[72,32], index: 2, kind: input, shape index: {}]
  %s3 = inlined_call_operand.hbm [shape: f32[1,8], index: 3, kind: output, shape index: {}]
  %s4 = sld [smem:[#allocation0]]
  $region22: #{tpu_custom_call.1} parent=0
    _
  %s6 = ssub.s32 1, %s4
  %s7 = scalar_select 0, %s6, %s4
  $region1: #{tpu_custom_call.1} parent=0
    #allocation2 [shape = 'u8[512]{0}', space=vmem, size = 0x400, scoped, tag = 'output window, operand 0, single buffered']
    #allocation3 [shape = 's32[1]{0}', space=sflag, size = 0x4, scoped, tag = 'scoped memory for tpu_custom_call.1']
    %8 = vsyncpa [#allocation3], 0
    // Predicated region
    $region2: #{tpu_custom_call.1} parent=1 // pred_check
      _
    $region3: #{tpu_custom_call.1} parent=1 // pred_check_branch
      %10 = sbr.rel (0) target = $region5
    $region4: #{tpu_custom_call.1} parent=1 // pred_region
      _
    $region5: #{tpu_custom_call.1} parent=1 // pred_fallthru
      _
    // Predicated region
    $region6: #{tpu_custom_call.1} parent=1 // pred_check
      _
    $region7: #{tpu_custom_call.1} parent=1 // pred_check_branch
      %12 = sbr.rel (0) target = $region9
    $region8: #{tpu_custom_call.1} parent=1 // pred_region
      _
    $region9: #{tpu_custom_call.1} parent=1 // pred_fallthru
      _
    // Predicated region
    $region10: #{tpu_custom_call.1} parent=1 // pred_check
      _
    $region11: #{tpu_custom_call.1} parent=1 // pred_check_branch
      %14 = sbr.rel (0) target = $region13
    $region12: #{tpu_custom_call.1} parent=1 // pred_region
      _
    $region13: #{tpu_custom_call.1} parent=1 // pred_fallthru
      _
    %v15 = vld [vmem:[%s2] sm:$0xff]
    %v16 = vld [vmem:[%s2 + $0x8] sm:$0xff]
    %v17 = vld [vmem:[%s2 + $0x10] sm:$0xf]
    %v18 = vld [vmem:[%s2 + $0x18] sm:$0xff]
    %v19 = vld [vmem:[%s2 + $0x20] sm:$0xff]
    %v20 = vld [vmem:[%s2 + $0x28] sm:$0xff]
    %v21 = vld [vmem:[%s2 + $0x30] sm:$0xff]
    %v22 = vld [vmem:[%s2 + $0x38] sm:$0x1]
    %v23 = vld [vmem:[%s2 + $0x40] sm:$0x1]
    %v24 = vld [vmem:[%s2 + $0x41] sm:$0x1]
    %v25 = vld [vmem:[%s2 + $0x42] sm:$0x1]
    %v26 = vld [vmem:[%s0] sm:$0xff]
    %v27 = vld [vmem:[%s1] sm:$0xff]
    %vm28 = vcmask 31744
    %v30 = vsel %vm28, %v27, 0
    %vm32 = vcmask 1043456
    %v34 = vsel %vm32, %v17, 0
    %36 = vmatprep.subr.mxu0 0.0
    %v37 = vand.u32 %v34, 4294901760
    %38 = vmatpush1.msra.mxu0 %v37
    %39 = vmatprep.subr.mxu0 0.0
    %40 = vmatpush1.msra.mxu0 0.0
    %41 = vmatprep.subr.mxu0 0.0
    %42 = vmatpush1.msra.mxu0 0.0
    %43 = vmatprep.subr.mxu0 0.0
    %44 = vmatpush1.msra.mxu0 0.0
    %45 = vmatprep.subr.mxu0 0.0
    %46 = vmatpush1.msra.mxu0 0.0
    %47 = vmatprep.subr.mxu0 0.0
    %48 = vmatpush1.msra.mxu0 0.0
    %49 = vmatprep.subr.mxu0 0.0
    %50 = vmatpush1.msra.mxu0 0.0
    %51 = vmatprep.subr.mxu0 0.0
    %52 = vmatpush1.msra.mxu0 0.0
    %53 = vmatprep.subr.mxu0 0.0
    %54 = vmatpush1.msra.mxu0 0.0
    %55 = vmatprep.subr.mxu0 0.0
    %56 = vmatpush1.msra.mxu0 0.0
    %57 = vmatprep.subr.mxu0 0.0
    %58 = vmatpush1.msra.mxu0 0.0
    %59 = vmatprep.subr.mxu0 0.0
    %60 = vmatpush1.msra.mxu0 0.0
    %61 = vmatprep.subr.mxu0 0.0
    %62 = vmatpush1.msra.mxu0 0.0
    %63 = vmatprep.subr.mxu0 0.0
    %64 = vmatpush1.msra.mxu0 0.0
    %65 = vmatprep.subr.mxu0 0.0
    %66 = vmatpush1.msra.mxu0 0.0
    %67 = vmatprep.subr.mxu0 0.0
    %68 = vmatpush1.msra.mxu0 0.0
    %69 = vmatprep.subr.mxu0 0.0
    %70 = vmatpush1.msra.mxu0 0.0
    %71 = vmatprep.subr.mxu0 0.0
    %72 = vmatpush1.msra.mxu0 0.0
    %73 = vmatprep.subr.mxu0 0.0
    %74 = vmatpush1.msra.mxu0 0.0
    %75 = vmatprep.subr.mxu0 0.0
    %76 = vmatpush1.msra.mxu0 0.0
    %77 = vmatprep.subr.mxu0 0.0
    %78 = vmatpush1.msra.mxu0 0.0
    %79 = vmatprep.subr.mxu0 0.0
    %80 = vmatpush1.msra.mxu0 0.0
    %81 = vmatprep.subr.mxu0 0.0
    %82 = vmatpush1.msra.mxu0 0.0
    %83 = vmatprep.subr.mxu0 0.0
    %84 = vmatpush1.msra.mxu0 0.0
    %85 = vmatprep.subr.mxu0 0.0
    %86 = vmatpush1.msra.mxu0 0.0
    %87 = vmatprep.subr.mxu0 0.0
    %88 = vmatpush1.msra.mxu0 0.0
    %89 = vmatprep.subr.mxu0 0.0
    %90 = vmatpush1.msra.mxu0 0.0
    %91 = vmatprep.subr.mxu0 0.0
    %92 = vmatpush1.msra.mxu0 0.0
    %93 = vmatprep.subr.mxu0 0.0
    %94 = vmatpush1.msra.mxu0 0.0
    %95 = vmatprep.subr.mxu0 0.0
    %96 = vmatpush1.msra.mxu0 0.0
    %97 = vmatprep.subr.mxu0 0.0
    %98 = vmatpush1.msra.mxu0 0.0
    %99 = vmatprep.subr.mxu0 0.0
    %100 = vmatpush1.msra.mxu0 0.0
    %101 = vmatprep.mubr.f32.mxu0 0.0
    %v102 = vand.u32 %v30, 4294901760
    %v103 = vsub.f32 %v30, %v102
    %v104 = vand.u32 %v103, 4294901760
    %v105 = vsub.f32 %v103, %v104
    %v106 = vand.u32 %v105, 4294901760
    %107 = vmatmul.mubr.f32.gmra.mrb[0].mxu0 %v106
    %v108 = vpop.f32.mrb[0].mxu0
    %v109 = vadd.f32 0.0, %v108
    %v110 = vpop.f32.mrb[0].mxu0
    %111 = vdwg.mxu0
    %112 = vmatprep.subr.mxu0 0.0
    %v113 = vand.u32 %v34, 4294901760
    %v114 = vsub.f32 %v34, %v113
    %v115 = vand.u32 %v114, 4294901760
    %v116 = vsub.f32 %v114, %v115
    %v117 = vand.u32 %v116, 4294901760
    %118 = vmatpush1.msra.mxu0 %v117
    %119 = vmatprep.subr.mxu0 0.0
    %120 = vmatpush1.msra.mxu0 0.0
    %121 = vmatprep.subr.mxu0 0.0
    %122 = vmatpush1.msra.mxu0 0.0
    %123 = vmatprep.subr.mxu0 0.0
    %124 = vmatpush1.msra.mxu0 0.0
    %125 = vmatprep.subr.mxu0 0.0
    %126 = vmatpush1.msra.mxu0 0.0
    %127 = vmatprep.subr.mxu0 0.0
    %128 = vmatpush1.msra.mxu0 0.0
    %129 = vmatprep.subr.mxu0 0.0
    %130 = vmatpush1.msra.mxu0 0.0
    %131 = vmatprep.subr.mxu0 0.0
    %132 = vmatpush1.msra.mxu0 0.0
    %133 = vmatprep.subr.mxu0 0.0
    %134 = vmatpush1.msra.mxu0 0.0
    %135 = vmatprep.subr.mxu0 0.0
    %136 = vmatpush1.msra.mxu0 0.0
    %137 = vmatprep.subr.mxu0 0.0
    %138 = vmatpush1.msra.mxu0 0.0
    %139 = vmatprep.subr.mxu0 0.0
    %140 = vmatpush1.msra.mxu0 0.0
    %141 = vmatprep.subr.mxu0 0.0
    %142 = vmatpush1.msra.mxu0 0.0
    %143 = vmatprep.subr.mxu0 0.0
    %144 = vmatpush1.msra.mxu0 0.0
    %145 = vmatprep.subr.mxu0 0.0
    %146 = vmatpush1.msra.mxu0 0.0
    %147 = vmatprep.subr.mxu0 0.0
    %148 = vmatpush1.msra.mxu0 0.0
    %149 = vmatprep.subr.mxu0 0.0
    %150 = vmatpush1.msra.mxu0 0.0
    %151 = vmatprep.subr.mxu0 0.0
    %152 = vmatpush1.msra.mxu0 0.0
    %153 = vmatprep.subr.mxu0 0.0
    %154 = vmatpush1.msra.mxu0 0.0
    %155 = vmatprep.subr.mxu0 0.0
    %156 = vmatpush1.msra.mxu0 0.0
    %157 = vmatprep.subr.mxu0 0.0
    %158 = vmatpush1.msra.mxu0 0.0
    %159 = vmatprep.subr.mxu0 0.0
    %160 = vmatpush1.msra.mxu0 0.0
    %161 = vmatprep.subr.mxu0 0.0
    %162 = vmatpush1.msra.mxu0 0.0
    %163 = vmatprep.subr.mxu0 0.0
    %164 = vmatpush1.msra.mxu0 0.0
    %165 = vmatprep.subr.mxu0 0.0
    %166 = vmatpush1.msra.mxu0 0.0
    %167 = vmatprep.subr.mxu0 0.0
    %168 = vmatpush1.msra.mxu0 0.0
    %169 = vmatprep.subr.mxu0 0.0
    %170 = vmatpush1.msra.mxu0 0.0
    %171 = vmatprep.subr.mxu0 0.0
    %172 = vmatpush1.msra.mxu0 0.0
    %173 = vmatprep.subr.mxu0 0.0
    %174 = vmatpush1.msra.mxu0 0.0
    %175 = vmatprep.subr.mxu0 0.0
    %176 = vmatpush1.msra.mxu0 0.0
    %177 = vmatprep.subr.mxu0 0.0
    %178 = vmatpush1.msra.mxu0 0.0
    %179 = vmatprep.subr.mxu0 0.0
    %180 = vmatpush1.msra.mxu0 0.0
    %181 = vmatprep.mubr.f32.mxu0 0.0
    %v182 = vand.u32 %v30, 4294901760
    %183 = vmatmul.mubr.f32.gmra.mrb[0].mxu0 %v182
    %v184 = vpop.f32.mrb[0].mxu0
    %v185 = vadd.f32 %v109, %v184
    %v186 = vpop.f32.mrb[0].mxu0
    %187 = vdwg.mxu0
    %188 = vmatprep.subr.mxu0 0.0
    %v189 = vand.u32 %v34, 4294901760
    %v190 = vsub.f32 %v34, %v189
    %191 = vmatpush1.msra.mxu0 %v190
    %192 = vmatprep.subr.mxu0 0.0
    %193 = vmatpush1.msra.mxu0 0.0
    %194 = vmatprep.subr.mxu0 0.0
    %195 = vmatpush1.msra.mxu0 0.0
    %196 = vmatprep.subr.mxu0 0.0
    %197 = vmatpush1.msra.mxu0 0.0
    %198 = vmatprep.subr.mxu0 0.0
    %199 = vmatpush1.msra.mxu0 0.0
    %200 = vmatprep.subr.mxu0 0.0
    %201 = vmatpush1.msra.mxu0 0.0
    %202 = vmatprep.subr.mxu0 0.0
    %203 = vmatpush1.msra.mxu0 0.0
    %204 = vmatprep.subr.mxu0 0.0
    %205 = vmatpush1.msra.mxu0 0.0
    %206 = vmatprep.subr.mxu0 0.0
    %207 = vmatpush1.msra.mxu0 0.0
    %208 = vmatprep.subr.mxu0 0.0
    %209 = vmatpush1.msra.mxu0 0.0
    %210 = vmatprep.subr.mxu0 0.0
    %211 = vmatpush1.msra.mxu0 0.0
    %212 = vmatprep.subr.mxu0 0.0
    %213 = vmatpush1.msra.mxu0 0.0
    %214 = vmatprep.subr.mxu0 0.0
    %215 = vmatpush1.msra.mxu0 0.0
    %216 = vmatprep.subr.mxu0 0.0
    %217 = vmatpush1.msra.mxu0 0.0
    %218 = vmatprep.subr.mxu0 0.0
    %219 = vmatpush1.msra.mxu0 0.0
    %220 = vmatprep.subr.mxu0 0.0
    %221 = vmatpush1.msra.mxu0 0.0
    %222 = vmatprep.subr.mxu0 0.0
    %223 = vmatpush1.msra.mxu0 0.0
    %224 = vmatprep.subr.mxu0 0.0
    %225 = vmatpush1.msra.mxu0 0.0
    %226 = vmatprep.subr.mxu0 0.0
    %227 = vmatpush1.msra.mxu0 0.0
    %228 = vmatprep.subr.mxu0 0.0
    %229 = vmatpush1.msra.mxu0 0.0
    %230 = vmatprep.subr.mxu0 0.0
    %231 = vmatpush1.msra.mxu0 0.0
    %232 = vmatprep.subr.mxu0 0.0
    %233 = vmatpush1.msra.mxu0 0.0
    %234 = vmatprep.subr.mxu0 0.0
    %235 = vmatpush1.msra.mxu0 0.0
    %236 = vmatprep.subr.mxu0 0.0
    %237 = vmatpush1.msra.mxu0 0.0
    %238 = vmatprep.subr.mxu0 0.0
    %239 = vmatpush1.msra.mxu0 0.0
    %240 = vmatprep.subr.mxu0 0.0
    %241 = vmatpush1.msra.mxu0 0.0
    %242 = vmatprep.subr.mxu0 0.0
    %243 = vmatpush1.msra.mxu0 0.0
    %244 = vmatprep.subr.mxu0 0.0
    %245 = vmatpush1.msra.mxu0 0.0
    %246 = vmatprep.subr.mxu0 0.0
    %247 = vmatpush1.msra.mxu0 0.0
    %248 = vmatprep.subr.mxu0 0.0
    %249 = vmatpush1.msra.mxu0 0.0
    %250 = vmatprep.subr.mxu0 0.0
    %251 = vmatpush1.msra.mxu0 0.0
    %252 = vmatprep.subr.mxu0 0.0
    %253 = vmatpush1.msra.mxu0 0.0
    %254 = vmatprep.mubr.f32.mxu0 0.0
    %v255 = vand.u32 %v30, 4294901760
    %v256 = vsub.f32 %v30, %v255
    %257 = vmatmul.mubr.f32.gmra.mrb[0].mxu0 %v256
    %v258 = vpop.f32.mrb[0].mxu0
    %v259 = vadd.f32 %v185, %v258
    %v260 = vpop.f32.mrb[0].mxu0
    %261 = vdwg.mxu0
    %262 = vmatprep.subr.mxu0 0.0
    %v263 = vand.u32 %v34, 4294901760
    %264 = vmatpush1.msra.mxu0 %v263
    %265 = vmatprep.subr.mxu0 0.0
    %266 = vmatpush1.msra.mxu0 0.0
    %267 = vmatprep.subr.mxu0 0.0
    %268 = vmatpush1.msra.mxu0 0.0
    %269 = vmatprep.subr.mxu0 0.0
    %270 = vmatpush1.msra.mxu0 0.0
    %271 = vmatprep.subr.mxu0 0.0
    %272 = vmatpush1.msra.mxu0 0.0
    %273 = vmatprep.subr.mxu0 0.0
    %274 = vmatpush1.msra.mxu0 0.0
    %275 = vmatprep.subr.mxu0 0.0
    %276 = vmatpush1.msra.mxu0 0.0
    %277 = vmatprep.subr.mxu0 0.0
    %278 = vmatpush1.msra.mxu0 0.0
    %279 = vmatprep.subr.mxu0 0.0
    %280 = vmatpush1.msra.mxu0 0.0
    %281 = vmatprep.subr.mxu0 0.0
    %282 = vmatpush1.msra.mxu0 0.0
    %283 = vmatprep.subr.mxu0 0.0
    %284 = vmatpush1.msra.mxu0 0.0
    %285 = vmatprep.subr.mxu0 0.0
    %286 = vmatpush1.msra.mxu0 0.0
    %287 = vmatprep.subr.mxu0 0.0
    %288 = vmatpush1.msra.mxu0 0.0
    %289 = vmatprep.subr.mxu0 0.0
    %290 = vmatpush1.msra.mxu0 0.0
    %291 = vmatprep.subr.mxu0 0.0
    %292 = vmatpush1.msra.mxu0 0.0
    %293 = vmatprep.subr.mxu0 0.0
    %294 = vmatpush1.msra.mxu0 0.0
    %295 = vmatprep.subr.mxu0 0.0
    %296 = vmatpush1.msra.mxu0 0.0
    %297 = vmatprep.subr.mxu0 0.0
    %298 = vmatpush1.msra.mxu0 0.0
    %299 = vmatprep.subr.mxu0 0.0
    %300 = vmatpush1.msra.mxu0 0.0
    %301 = vmatprep.subr.mxu0 0.0
    %302 = vmatpush1.msra.mxu0 0.0
    %303 = vmatprep.subr.mxu0 0.0
    %304 = vmatpush1.msra.mxu0 0.0
    %305 = vmatprep.subr.mxu0 0.0
    %306 = vmatpush1.msra.mxu0 0.0
    %307 = vmatprep.subr.mxu0 0.0
    %308 = vmatpush1.msra.mxu0 0.0
    %309 = vmatprep.subr.mxu0 0.0
    %310 = vmatpush1.msra.mxu0 0.0
    %311 = vmatprep.subr.mxu0 0.0
    %312 = vmatpush1.msra.mxu0 0.0
    %313 = vmatprep.subr.mxu0 0.0
    %314 = vmatpush1.msra.mxu0 0.0
    %315 = vmatprep.subr.mxu0 0.0
    %316 = vmatpush1.msra.mxu0 0.0
    %317 = vmatprep.subr.mxu0 0.0
    %318 = vmatpush1.msra.mxu0 0.0
    %319 = vmatprep.subr.mxu0 0.0
    %320 = vmatpush1.msra.mxu0 0.0
    %321 = vmatprep.subr.mxu0 0.0
    %322 = vmatpush1.msra.mxu0 0.0
    %323 = vmatprep.subr.mxu0 0.0
    %324 = vmatpush1.msra.mxu0 0.0
    %325 = vmatprep.subr.mxu0 0.0
    %326 = vmatpush1.msra.mxu0 0.0
    %327 = vmatprep.mubr.f32.mxu0 0.0
    %v328 = vand.u32 %v30, 4294901760
    %v329 = vsub.f32 %v30, %v328
    %v330 = vand.u32 %v329, 4294901760
    %331 = vmatmul.mubr.f32.gmra.mrb[0].mxu0 %v330
    %v332 = vpop.f32.mrb[0].mxu0
    %v333 = vadd.f32 %v259, %v332
    %v334 = vpop.f32.mrb[0].mxu0
    %335 = vdwg.mxu0
    %336 = vmatprep.subr.mxu0 0.0
    %v337 = vand.u32 %v34, 4294901760
    %v338 = vsub.f32 %v34, %v337
    %v339 = vand.u32 %v338, 4294901760
    %340 = vmatpush1.msra.mxu0 %v339
    %341 = vmatprep.subr.mxu0 0.0
    %342 = vmatpush1.msra.mxu0 0.0
    %343 = vmatprep.subr.mxu0 0.0
    %344 = vmatpush1.msra.mxu0 0.0
    %345 = vmatprep.subr.mxu0 0.0
    %346 = vmatpush1.msra.mxu0 0.0
    %347 = vmatprep.subr.mxu0 0.0
    %348 = vmatpush1.msra.mxu0 0.0
    %349 = vmatprep.subr.mxu0 0.0
    %350 = vmatpush1.msra.mxu0 0.0
    %351 = vmatprep.subr.mxu0 0.0
    %352 = vmatpush1.msra.mxu0 0.0
    %353 = vmatprep.subr.mxu0 0.0
    %354 = vmatpush1.msra.mxu0 0.0
    %355 = vmatprep.subr.mxu0 0.0
    %356 = vmatpush1.msra.mxu0 0.0
    %357 = vmatprep.subr.mxu0 0.0
    %358 = vmatpush1.msra.mxu0 0.0
    %359 = vmatprep.subr.mxu0 0.0
    %360 = vmatpush1.msra.mxu0 0.0
    %361 = vmatprep.subr.mxu0 0.0
    %362 = vmatpush1.msra.mxu0 0.0
    %363 = vmatprep.subr.mxu0 0.0
    %364 = vmatpush1.msra.mxu0 0.0
    %365 = vmatprep.subr.mxu0 0.0
    %366 = vmatpush1.msra.mxu0 0.0
    %367 = vmatprep.subr.mxu0 0.0
    %368 = vmatpush1.msra.mxu0 0.0
    %369 = vmatprep.subr.mxu0 0.0
    %370 = vmatpush1.msra.mxu0 0.0
    %371 = vmatprep.subr.mxu0 0.0
    %372 = vmatpush1.msra.mxu0 0.0
    %373 = vmatprep.subr.mxu0 0.0
    %374 = vmatpush1.msra.mxu0 0.0
    %375 = vmatprep.subr.mxu0 0.0
    %376 = vmatpush1.msra.mxu0 0.0
    %377 = vmatprep.subr.mxu0 0.0
    %378 = vmatpush1.msra.mxu0 0.0
    %379 = vmatprep.subr.mxu0 0.0
    %380 = vmatpush1.msra.mxu0 0.0
    %381 = vmatprep.subr.mxu0 0.0
    %382 = vmatpush1.msra.mxu0 0.0
    %383 = vmatprep.subr.mxu0 0.0
    %384 = vmatpush1.msra.mxu0 0.0
    %385 = vmatprep.subr.mxu0 0.0
    %386 = vmatpush1.msra.mxu0 0.0
    %387 = vmatprep.subr.mxu0 0.0
    %388 = vmatpush1.msra.mxu0 0.0
    %389 = vmatprep.subr.mxu0 0.0
    %390 = vmatpush1.msra.mxu0 0.0
    %391 = vmatprep.subr.mxu0 0.0
    %392 = vmatpush1.msra.mxu0 0.0
    %393 = vmatprep.subr.mxu0 0.0
    %394 = vmatpush1.msra.mxu0 0.0
    %395 = vmatprep.subr.mxu0 0.0
    %396 = vmatpush1.msra.mxu0 0.0
    %397 = vmatprep.subr.mxu0 0.0
    %398 = vmatpush1.msra.mxu0 0.0
    %399 = vmatprep.subr.mxu0 0.0
    %400 = vmatpush1.msra.mxu0 0.0
    %401 = vmatprep.subr.mxu0 0.0
    %402 = vmatpush1.msra.mxu0 0.0
    %403 = vmatprep.mubr.f32.mxu0 0.0
    %v404 = vand.u32 %v30, 4294901760
    %405 = vmatmul.mubr.f32.gmra.mrb[0].mxu0 %v404
    %v406 = vpop.f32.mrb[0].mxu0
    %v407 = vadd.f32 %v333, %v406
    %v408 = vpop.f32.mrb[0].mxu0
    %409 = vdwg.mxu0
    %410 = vmatprep.subr.mxu0 0.0
    %v411 = vand.u32 %v34, 4294901760
    %412 = vmatpush1.msra.mxu0 %v411
    %413 = vmatprep.subr.mxu0 0.0
    %414 = vmatpush1.msra.mxu0 0.0
    %415 = vmatprep.subr.mxu0 0.0
    %416 = vmatpush1.msra.mxu0 0.0
    %417 = vmatprep.subr.mxu0 0.0
    %418 = vmatpush1.msra.mxu0 0.0
    %419 = vmatprep.subr.mxu0 0.0
    %420 = vmatpush1.msra.mxu0 0.0
    %421 = vmatprep.subr.mxu0 0.0
    %422 = vmatpush1.msra.mxu0 0.0
    %423 = vmatprep.subr.mxu0 0.0
    %424 = vmatpush1.msra.mxu0 0.0
    %425 = vmatprep.subr.mxu0 0.0
    %426 = vmatpush1.msra.mxu0 0.0
    %427 = vmatprep.subr.mxu0 0.0
    %428 = vmatpush1.msra.mxu0 0.0
    %429 = vmatprep.subr.mxu0 0.0
    %430 = vmatpush1.msra.mxu0 0.0
    %431 = vmatprep.subr.mxu0 0.0
    %432 = vmatpush1.msra.mxu0 0.0
    %433 = vmatprep.subr.mxu0 0.0
    %434 = vmatpush1.msra.mxu0 0.0
    %435 = vmatprep.subr.mxu0 0.0
    %436 = vmatpush1.msra.mxu0 0.0
    %437 = vmatprep.subr.mxu0 0.0
    %438 = vmatpush1.msra.mxu0 0.0
    %439 = vmatprep.subr.mxu0 0.0
    %440 = vmatpush1.msra.mxu0 0.0
    %441 = vmatprep.subr.mxu0 0.0
    %442 = vmatpush1.msra.mxu0 0.0
    %443 = vmatprep.subr.mxu0 0.0
    %444 = vmatpush1.msra.mxu0 0.0
    %445 = vmatprep.subr.mxu0 0.0
    %446 = vmatpush1.msra.mxu0 0.0
    %447 = vmatprep.subr.mxu0 0.0
    %448 = vmatpush1.msra.mxu0 0.0
    %449 = vmatprep.subr.mxu0 0.0
    %450 = vmatpush1.msra.mxu0 0.0
    %451 = vmatprep.subr.mxu0 0.0
    %452 = vmatpush1.msra.mxu0 0.0
    %453 = vmatprep.subr.mxu0 0.0
    %454 = vmatpush1.msra.mxu0 0.0
    %455 = vmatprep.subr.mxu0 0.0
    %456 = vmatpush1.msra.mxu0 0.0
    %457 = vmatprep.subr.mxu0 0.0
    %458 = vmatpush1.msra.mxu0 0.0
    %459 = vmatprep.subr.mxu0 0.0
    %460 = vmatpush1.msra.mxu0 0.0
    %461 = vmatprep.subr.mxu0 0.0
    %462 = vmatpush1.msra.mxu0 0.0
    %463 = vmatprep.subr.mxu0 0.0
    %464 = vmatpush1.msra.mxu0 0.0
    %465 = vmatprep.subr.mxu0 0.0
    %466 = vmatpush1.msra.mxu0 0.0
    %467 = vmatprep.subr.mxu0 0.0
    %468 = vmatpush1.msra.mxu0 0.0
    %469 = vmatprep.subr.mxu0 0.0
    %470 = vmatpush1.msra.mxu0 0.0
    %471 = vmatprep.subr.mxu0 0.0
    %472 = vmatpush1.msra.mxu0 0.0
    %473 = vmatprep.subr.mxu0 0.0
    %474 = vmatpush1.msra.mxu0 0.0
    %475 = vmatprep.mubr.f32.mxu0 0.0
    %v476 = vand.u32 %v30, 4294901760
    %477 = vmatmul.mubr.f32.gmra.mrb[0].mxu0 %v476
    %v478 = vpop.f32.mrb[0].mxu0
    %v479 = vadd.f32 %v407, %v478
    %v480 = vpop.f32.mrb[0].mxu0
    %481 = vdwg.mxu0
    %vm482 = vcmask 130048
    %v484 = vsel %vm482, %v26, 0
    %486 = vmatprep.subr.mxu0 0.0
    %v487 = vand.u32 %v15, 4294901760
    %488 = vmatpush1.msra.mxu0 %v487
    %489 = vmatprep.subr.mxu0 0.0
    %v490 = vand.u32 %v16, 4294901760
    %491 = vmatpush1.msra.mxu0 %v490
    %492 = vmatprep.subr.mxu0 0.0
    %493 = vmatpush1.msra.mxu0 0.0
    %494 = vmatprep.subr.mxu0 0.0
    %495 = vmatpush1.msra.mxu0 0.0
    %496 = vmatprep.subr.mxu0 0.0
    %497 = vmatpush1.msra.mxu0 0.0
    %498 = vmatprep.subr.mxu0 0.0
    %499 = vmatpush1.msra.mxu0 0.0
    %500 = vmatprep.subr.mxu0 0.0
    %501 = vmatpush1.msra.mxu0 0.0
    %502 = vmatprep.subr.mxu0 0.0
    %503 = vmatpush1.msra.mxu0 0.0
    %504 = vmatprep.subr.mxu0 0.0
    %505 = vmatpush1.msra.mxu0 0.0
    %506 = vmatprep.subr.mxu0 0.0
    %507 = vmatpush1.msra.mxu0 0.0
    %508 = vmatprep.subr.mxu0 0.0
    %509 = vmatpush1.msra.mxu0 0.0
    %510 = vmatprep.subr.mxu0 0.0
    %511 = vmatpush1.msra.mxu0 0.0
    %512 = vmatprep.subr.mxu0 0.0
    %513 = vmatpush1.msra.mxu0 0.0
    %514 = vmatprep.subr.mxu0 0.0
    %515 = vmatpush1.msra.mxu0 0.0
    %516 = vmatprep.subr.mxu0 0.0
    %517 = vmatpush1.msra.mxu0 0.0
    %518 = vmatprep.subr.mxu0 0.0
    %519 = vmatpush1.msra.mxu0 0.0
    %520 = vmatprep.subr.mxu0 0.0
    %521 = vmatpush1.msra.mxu0 0.0
    %522 = vmatprep.subr.mxu0 0.0
    %523 = vmatpush1.msra.mxu0 0.0
    %524 = vmatprep.subr.mxu0 0.0
    %525 = vmatpush1.msra.mxu0 0.0
    %526 = vmatprep.subr.mxu0 0.0
    %527 = vmatpush1.msra.mxu0 0.0
    %528 = vmatprep.subr.mxu0 0.0
    %529 = vmatpush1.msra.mxu0 0.0
    %530 = vmatprep.subr.mxu0 0.0
    %531 = vmatpush1.msra.mxu0 0.0
    %532 = vmatprep.subr.mxu0 0.0
    %533 = vmatpush1.msra.mxu0 0.0
    %534 = vmatprep.subr.mxu0 0.0
    %535 = vmatpush1.msra.mxu0 0.0
    %536 = vmatprep.subr.mxu0 0.0
    %537 = vmatpush1.msra.mxu0 0.0
    %538 = vmatprep.subr.mxu0 0.0
    %539 = vmatpush1.msra.mxu0 0.0
    %540 = vmatprep.subr.mxu0 0.0
    %541 = vmatpush1.msra.mxu0 0.0
    %542 = vmatprep.subr.mxu0 0.0
    %543 = vmatpush1.msra.mxu0 0.0
    %544 = vmatprep.subr.mxu0 0.0
    %545 = vmatpush1.msra.mxu0 0.0
    %546 = vmatprep.subr.mxu0 0.0
    %547 = vmatpush1.msra.mxu0 0.0
    %548 = vmatprep.subr.mxu0 0.0
    %549 = vmatpush1.msra.mxu0 0.0
    %550 = vmatprep.subr.mxu0 0.0
    %551 = vmatpush1.msra.mxu0 0.0
    %552 = vmatprep.mubr.f32.mxu0 0.0
    %v553 = vand.u32 %v484, 4294901760
    %v554 = vsub.f32 %v484, %v553
    %v555 = vand.u32 %v554, 4294901760
    %v556 = vsub.f32 %v554, %v555
    %v557 = vand.u32 %v556, 4294901760
    %558 = vmatmul.mubr.f32.gmra.mrb[0].mxu0 %v557
    %v559 = vpop.f32.mrb[0].mxu0
    %v560 = vadd.f32 %v479, %v559
    %v561 = vpop.f32.mrb[0].mxu0
    %562 = vdwg.mxu0
    %563 = vmatprep.subr.mxu0 0.0
    %v564 = vand.u32 %v15, 4294901760
    %v565 = vsub.f32 %v15, %v564
    %v566 = vand.u32 %v565, 4294901760
    %v567 = vsub.f32 %v565, %v566
    %v568 = vand.u32 %v567, 4294901760
    %569 = vmatpush1.msra.mxu0 %v568
    %570 = vmatprep.subr.mxu0 0.0
    %v571 = vand.u32 %v16, 4294901760
    %v572 = vsub.f32 %v16, %v571
    %v573 = vand.u32 %v572, 4294901760
    %v574 = vsub.f32 %v572, %v573
    %v575 = vand.u32 %v574, 4294901760
    %576 = vmatpush1.msra.mxu0 %v575
    %577 = vmatprep.subr.mxu0 0.0
    %578 = vmatpush1.msra.mxu0 0.0
    %579 = vmatprep.subr.mxu0 0.0
    %580 = vmatpush1.msra.mxu0 0.0
    %581 = vmatprep.subr.mxu0 0.0
    %582 = vmatpush1.msra.mxu0 0.0
    %583 = vmatprep.subr.mxu0 0.0
    %584 = vmatpush1.msra.mxu0 0.0
    %585 = vmatprep.subr.mxu0 0.0
    %586 = vmatpush1.msra.mxu0 0.0
    %587 = vmatprep.subr.mxu0 0.0
    %588 = vmatpush1.msra.mxu0 0.0
    %589 = vmatprep.subr.mxu0 0.0
    %590 = vmatpush1.msra.mxu0 0.0
    %591 = vmatprep.subr.mxu0 0.0
    %592 = vmatpush1.msra.mxu0 0.0
    %593 = vmatprep.subr.mxu0 0.0
    %594 = vmatpush1.msra.mxu0 0.0
    %595 = vmatprep.subr.mxu0 0.0
    %596 = vmatpush1.msra.mxu0 0.0
    %597 = vmatprep.subr.mxu0 0.0
    %598 = vmatpush1.msra.mxu0 0.0
    %599 = vmatprep.subr.mxu0 0.0
    %600 = vmatpush1.msra.mxu0 0.0
    %601 = vmatprep.subr.mxu0 0.0
    %602 = vmatpush1.msra.mxu0 0.0
    %603 = vmatprep.subr.mxu0 0.0
    %604 = vmatpush1.msra.mxu0 0.0
    %605 = vmatprep.subr.mxu0 0.0
    %606 = vmatpush1.msra.mxu0 0.0
    %607 = vmatprep.subr.mxu0 0.0
    %608 = vmatpush1.msra.mxu0 0.0
    %609 = vmatprep.subr.mxu0 0.0
    %610 = vmatpush1.msra.mxu0 0.0
    %611 = vmatprep.subr.mxu0 0.0
    %612 = vmatpush1.msra.mxu0 0.0
    %613 = vmatprep.subr.mxu0 0.0
    %614 = vmatpush1.msra.mxu0 0.0
    %615 = vmatprep.subr.mxu0 0.0
    %616 = vmatpush1.msra.mxu0 0.0
    %617 = vmatprep.subr.mxu0 0.0
    %618 = vmatpush1.msra.mxu0 0.0
    %619 = vmatprep.subr.mxu0 0.0
    %620 = vmatpush1.msra.mxu0 0.0
    %621 = vmatprep.subr.mxu0 0.0
    %622 = vmatpush1.msra.mxu0 0.0
    %623 = vmatprep.subr.mxu0 0.0
    %624 = vmatpush1.msra.mxu0 0.0
    %625 = vmatprep.subr.mxu0 0.0
    %626 = vmatpush1.msra.mxu0 0.0
    %627 = vmatprep.subr.mxu0 0.0
    %628 = vmatpush1.msra.mxu0 0.0
    %629 = vmatprep.subr.mxu0 0.0
    %630 = vmatpush1.msra.mxu0 0.0
    %631 = vmatprep.subr.mxu0 0.0
    %632 = vmatpush1.msra.mxu0 0.0
    %633 = vmatprep.subr.mxu0 0.0
    %634 = vmatpush1.msra.mxu0 0.0
    %635 = vmatprep.subr.mxu0 0.0
    %636 = vmatpush1.msra.mxu0 0.0
    %637 = vmatprep.mubr.f32.mxu0 0.0
    %v638 = vand.u32 %v484, 4294901760
    %639 = vmatmul.mubr.f32.gmra.mrb[0].mxu0 %v638
    %v640 = vpop.f32.mrb[0].mxu0
    %v641 = vadd.f32 %v560, %v640
    %v642 = vpop.f32.mrb[0].mxu0
    %643 = vdwg.mxu0
    %644 = vmatprep.subr.mxu0 0.0
    %v645 = vand.u32 %v15, 4294901760
    %v646 = vsub.f32 %v15, %v645
    %647 = vmatpush1.msra.mxu0 %v646
    %648 = vmatprep.subr.mxu0 0.0
    %v649 = vand.u32 %v16, 4294901760
    %v650 = vsub.f32 %v16, %v649
    %651 = vmatpush1.msra.mxu0 %v650
    %652 = vmatprep.subr.mxu0 0.0
    %653 = vmatpush1.msra.mxu0 0.0
    %654 = vmatprep.subr.mxu0 0.0
    %655 = vmatpush1.msra.mxu0 0.0
    %656 = vmatprep.subr.mxu0 0.0
    %657 = vmatpush1.msra.mxu0 0.0
    %658 = vmatprep.subr.mxu0 0.0
    %659 = vmatpush1.msra.mxu0 0.0
    %660 = vmatprep.subr.mxu0 0.0
    %661 = vmatpush1.msra.mxu0 0.0
    %662 = vmatprep.subr.mxu0 0.0
    %663 = vmatpush1.msra.mxu0 0.0
    %664 = vmatprep.subr.mxu0 0.0
    %665 = vmatpush1.msra.mxu0 0.0
    %666 = vmatprep.subr.mxu0 0.0
    %667 = vmatpush1.msra.mxu0 0.0
    %668 = vmatprep.subr.mxu0 0.0
    %669 = vmatpush1.msra.mxu0 0.0
    %670 = vmatprep.subr.mxu0 0.0
    %671 = vmatpush1.msra.mxu0 0.0
    %672 = vmatprep.subr.mxu0 0.0
    %673 = vmatpush1.msra.mxu0 0.0
    %674 = vmatprep.subr.mxu0 0.0
    %675 = vmatpush1.msra.mxu0 0.0
    %676 = vmatprep.subr.mxu0 0.0
    %677 = vmatpush1.msra.mxu0 0.0
    %678 = vmatprep.subr.mxu0 0.0
    %679 = vmatpush1.msra.mxu0 0.0
    %680 = vmatprep.subr.mxu0 0.0
    %681 = vmatpush1.msra.mxu0 0.0
    %682 = vmatprep.subr.mxu0 0.0
    %683 = vmatpush1.msra.mxu0 0.0
    %684 = vmatprep.subr.mxu0 0.0
    %685 = vmatpush1.msra.mxu0 0.0
    %686 = vmatprep.subr.mxu0 0.0
    %687 = vmatpush1.msra.mxu0 0.0
    %688 = vmatprep.subr.mxu0 0.0
    %689 = vmatpush1.msra.mxu0 0.0
    %690 = vmatprep.subr.mxu0 0.0
    %691 = vmatpush1.msra.mxu0 0.0
    %692 = vmatprep.subr.mxu0 0.0
    %693 = vmatpush1.msra.mxu0 0.0
    %694 = vmatprep.subr.mxu0 0.0
    %695 = vmatpush1.msra.mxu0 0.0
    %696 = vmatprep.subr.mxu0 0.0
    %697 = vmatpush1.msra.mxu0 0.0
    %698 = vmatprep.subr.mxu0 0.0
    %699 = vmatpush1.msra.mxu0 0.0
    %700 = vmatprep.subr.mxu0 0.0
    %701 = vmatpush1.msra.mxu0 0.0
    %702 = vmatprep.subr.mxu0 0.0
    %703 = vmatpush1.msra.mxu0 0.0
    %704 = vmatprep.subr.mxu0 0.0
    %705 = vmatpush1.msra.mxu0 0.0
    %706 = vmatprep.subr.mxu0 0.0
    %707 = vmatpush1.msra.mxu0 0.0
    %708 = vmatprep.subr.mxu0 0.0
    %709 = vmatpush1.msra.mxu0 0.0
    %710 = vmatprep.subr.mxu0 0.0
    %711 = vmatpush1.msra.mxu0 0.0
    %712 = vmatprep.mubr.f32.mxu0 0.0
    %v713 = vand.u32 %v484, 4294901760
    %v714 = vsub.f32 %v484, %v713
    %715 = vmatmul.mubr.f32.gmra.mrb[0].mxu0 %v714
    %v716 = vpop.f32.mrb[0].mxu0
    %v717 = vadd.f32 %v641, %v716
    %v718 = vpop.f32.mrb[0].mxu0
    %719 = vdwg.mxu0
    %720 = vmatprep.subr.mxu0 0.0
    %v721 = vand.u32 %v15, 4294901760
    %722 = vmatpush1.msra.mxu0 %v721
    %723 = vmatprep.subr.mxu0 0.0
    %v724 = vand.u32 %v16, 4294901760
    %725 = vmatpush1.msra.mxu0 %v724
    %726 = vmatprep.subr.mxu0 0.0
    %727 = vmatpush1.msra.mxu0 0.0
    %728 = vmatprep.subr.mxu0 0.0
    %729 = vmatpush1.msra.mxu0 0.0
    %730 = vmatprep.subr.mxu0 0.0
    %731 = vmatpush1.msra.mxu0 0.0
    %732 = vmatprep.subr.mxu0 0.0
    %733 = vmatpush1.msra.mxu0 0.0
    %734 = vmatprep.subr.mxu0 0.0
    %735 = vmatpush1.msra.mxu0 0.0
    %736 = vmatprep.subr.mxu0 0.0
    %737 = vmatpush1.msra.mxu0 0.0
    %738 = vmatprep.subr.mxu0 0.0
    %739 = vmatpush1.msra.mxu0 0.0
    %740 = vmatprep.subr.mxu0 0.0
    %741 = vmatpush1.msra.mxu0 0.0
    %742 = vmatprep.subr.mxu0 0.0
    %743 = vmatpush1.msra.mxu0 0.0
    %744 = vmatprep.subr.mxu0 0.0
    %745 = vmatpush1.msra.mxu0 0.0
    %746 = vmatprep.subr.mxu0 0.0
    %747 = vmatpush1.msra.mxu0 0.0
    %748 = vmatprep.subr.mxu0 0.0
    %749 = vmatpush1.msra.mxu0 0.0
    %750 = vmatprep.subr.mxu0 0.0
    %751 = vmatpush1.msra.mxu0 0.0
    %752 = vmatprep.subr.mxu0 0.0
    %753 = vmatpush1.msra.mxu0 0.0
    %754 = vmatprep.subr.mxu0 0.0
    %755 = vmatpush1.msra.mxu0 0.0
    %756 = vmatprep.subr.mxu0 0.0
    %757 = vmatpush1.msra.mxu0 0.0
    %758 = vmatprep.subr.mxu0 0.0
    %759 = vmatpush1.msra.mxu0 0.0
    %760 = vmatprep.subr.mxu0 0.0
    %761 = vmatpush1.msra.mxu0 0.0
    %762 = vmatprep.subr.mxu0 0.0
    %763 = vmatpush1.msra.mxu0 0.0
    %764 = vmatprep.subr.mxu0 0.0
    %765 = vmatpush1.msra.mxu0 0.0
    %766 = vmatprep.subr.mxu0 0.0
    %767 = vmatpush1.msra.mxu0 0.0
    %768 = vmatprep.subr.mxu0 0.0
    %769 = vmatpush1.msra.mxu0 0.0
    %770 = vmatprep.subr.mxu0 0.0
    %771 = vmatpush1.msra.mxu0 0.0
    %772 = vmatprep.subr.mxu0 0.0
    %773 = vmatpush1.msra.mxu0 0.0
    %774 = vmatprep.subr.mxu0 0.0
    %775 = vmatpush1.msra.mxu0 0.0
    %776 = vmatprep.subr.mxu0 0.0
    %777 = vmatpush1.msra.mxu0 0.0
    %778 = vmatprep.subr.mxu0 0.0
    %779 = vmatpush1.msra.mxu0 0.0
    %780 = vmatprep.subr.mxu0 0.0
    %781 = vmatpush1.msra.mxu0 0.0
    %782 = vmatprep.subr.mxu0 0.0
    %783 = vmatpush1.msra.mxu0 0.0
    %784 = vmatprep.subr.mxu0 0.0
    %785 = vmatpush1.msra.mxu0 0.0
    %786 = vmatprep.mubr.f32.mxu0 0.0
    %v787 = vand.u32 %v484, 4294901760
    %v788 = vsub.f32 %v484, %v787
    %v789 = vand.u32 %v788, 4294901760
    %790 = vmatmul.mubr.f32.gmra.mrb[0].mxu0 %v789
    %v791 = vpop.f32.mrb[0].mxu0
    %v792 = vadd.f32 %v717, %v791
    %v793 = vpop.f32.mrb[0].mxu0
    %794 = vdwg.mxu0
    %795 = vmatprep.subr.mxu0 0.0
    %v796 = vand.u32 %v15, 4294901760
    %v797 = vsub.f32 %v15, %v796
    %v798 = vand.u32 %v797, 4294901760
    %799 = vmatpush1.msra.mxu0 %v798
    %800 = vmatprep.subr.mxu0 0.0
    %v801 = vand.u32 %v16, 4294901760
    %v802 = vsub.f32 %v16, %v801
    %v803 = vand.u32 %v802, 4294901760
    %804 = vmatpush1.msra.mxu0 %v803
    %805 = vmatprep.subr.mxu0 0.0
    %806 = vmatpush1.msra.mxu0 0.0
    %807 = vmatprep.subr.mxu0 0.0
    %808 = vmatpush1.msra.mxu0 0.0
    %809 = vmatprep.subr.mxu0 0.0
    %810 = vmatpush1.msra.mxu0 0.0
    %811 = vmatprep.subr.mxu0 0.0
    %812 = vmatpush1.msra.mxu0 0.0
    %813 = vmatprep.subr.mxu0 0.0
    %814 = vmatpush1.msra.mxu0 0.0
    %815 = vmatprep.subr.mxu0 0.0
    %816 = vmatpush1.msra.mxu0 0.0
    %817 = vmatprep.subr.mxu0 0.0
    %818 = vmatpush1.msra.mxu0 0.0
    %819 = vmatprep.subr.mxu0 0.0
    %820 = vmatpush1.msra.mxu0 0.0
    %821 = vmatprep.subr.mxu0 0.0
    %822 = vmatpush1.msra.mxu0 0.0
    %823 = vmatprep.subr.mxu0 0.0
    %824 = vmatpush1.msra.mxu0 0.0
    %825 = vmatprep.subr.mxu0 0.0
    %826 = vmatpush1.msra.mxu0 0.0
    %827 = vmatprep.subr.mxu0 0.0
    %828 = vmatpush1.msra.mxu0 0.0
    %829 = vmatprep.subr.mxu0 0.0
    %830 = vmatpush1.msra.mxu0 0.0
    %831 = vmatprep.subr.mxu0 0.0
    %832 = vmatpush1.msra.mxu0 0.0
    %833 = vmatprep.subr.mxu0 0.0
    %834 = vmatpush1.msra.mxu0 0.0
    %835 = vmatprep.subr.mxu0 0.0
    %836 = vmatpush1.msra.mxu0 0.0
    %837 = vmatprep.subr.mxu0 0.0
    %838 = vmatpush1.msra.mxu0 0.0
    %839 = vmatprep.subr.mxu0 0.0
    %840 = vmatpush1.msra.mxu0 0.0
    %841 = vmatprep.subr.mxu0 0.0
    %842 = vmatpush1.msra.mxu0 0.0
    %843 = vmatprep.subr.mxu0 0.0
    %844 = vmatpush1.msra.mxu0 0.0
    %845 = vmatprep.subr.mxu0 0.0
    %846 = vmatpush1.msra.mxu0 0.0
    %847 = vmatprep.subr.mxu0 0.0
    %848 = vmatpush1.msra.mxu0 0.0
    %849 = vmatprep.subr.mxu0 0.0
    %850 = vmatpush1.msra.mxu0 0.0
    %851 = vmatprep.subr.mxu0 0.0
    %852 = vmatpush1.msra.mxu0 0.0
    %853 = vmatprep.subr.mxu0 0.0
    %854 = vmatpush1.msra.mxu0 0.0
    %855 = vmatprep.subr.mxu0 0.0
    %856 = vmatpush1.msra.mxu0 0.0
    %857 = vmatprep.subr.mxu0 0.0
    %858 = vmatpush1.msra.mxu0 0.0
    %859 = vmatprep.subr.mxu0 0.0
    %860 = vmatpush1.msra.mxu0 0.0
    %861 = vmatprep.subr.mxu0 0.0
    %862 = vmatpush1.msra.mxu0 0.0
    %863 = vmatprep.subr.mxu0 0.0
    %864 = vmatpush1.msra.mxu0 0.0
    %865 = vmatprep.mubr.f32.mxu0 0.0
    %v866 = vand.u32 %v484, 4294901760
    %867 = vmatmul.mubr.f32.gmra.mrb[0].mxu0 %v866
    %v868 = vpop.f32.mrb[0].mxu0
    %v869 = vadd.f32 %v792, %v868
    %v870 = vpop.f32.mrb[0].mxu0
    %871 = vdwg.mxu0
    %872 = vmatprep.subr.mxu0 0.0
    %v873 = vand.u32 %v15, 4294901760
    %874 = vmatpush1.msra.mxu0 %v873
    %875 = vmatprep.subr.mxu0 0.0
    %v876 = vand.u32 %v16, 4294901760
    %877 = vmatpush1.msra.mxu0 %v876
    %878 = vmatprep.subr.mxu0 0.0
    %879 = vmatpush1.msra.mxu0 0.0
    %880 = vmatprep.subr.mxu0 0.0
    %881 = vmatpush1.msra.mxu0 0.0
    %882 = vmatprep.subr.mxu0 0.0
    %883 = vmatpush1.msra.mxu0 0.0
    %884 = vmatprep.subr.mxu0 0.0
    %885 = vmatpush1.msra.mxu0 0.0
    %886 = vmatprep.subr.mxu0 0.0
    %887 = vmatpush1.msra.mxu0 0.0
    %888 = vmatprep.subr.mxu0 0.0
    %889 = vmatpush1.msra.mxu0 0.0
    %890 = vmatprep.subr.mxu0 0.0
    %891 = vmatpush1.msra.mxu0 0.0
    %892 = vmatprep.subr.mxu0 0.0
    %893 = vmatpush1.msra.mxu0 0.0
    %894 = vmatprep.subr.mxu0 0.0
    %895 = vmatpush1.msra.mxu0 0.0
    %896 = vmatprep.subr.mxu0 0.0
    %897 = vmatpush1.msra.mxu0 0.0
    %898 = vmatprep.subr.mxu0 0.0
    %899 = vmatpush1.msra.mxu0 0.0
    %900 = vmatprep.subr.mxu0 0.0
    %901 = vmatpush1.msra.mxu0 0.0
    %902 = vmatprep.subr.mxu0 0.0
    %903 = vmatpush1.msra.mxu0 0.0
    %904 = vmatprep.subr.mxu0 0.0
    %905 = vmatpush1.msra.mxu0 0.0
    %906 = vmatprep.subr.mxu0 0.0
    %907 = vmatpush1.msra.mxu0 0.0
    %908 = vmatprep.subr.mxu0 0.0
    %909 = vmatpush1.msra.mxu0 0.0
    %910 = vmatprep.subr.mxu0 0.0
    %911 = vmatpush1.msra.mxu0 0.0
    %912 = vmatprep.subr.mxu0 0.0
    %913 = vmatpush1.msra.mxu0 0.0
    %914 = vmatprep.subr.mxu0 0.0
    %915 = vmatpush1.msra.mxu0 0.0
    %916 = vmatprep.subr.mxu0 0.0
    %917 = vmatpush1.msra.mxu0 0.0
    %918 = vmatprep.subr.mxu0 0.0
    %919 = vmatpush1.msra.mxu0 0.0
    %920 = vmatprep.subr.mxu0 0.0
    %921 = vmatpush1.msra.mxu0 0.0
    %922 = vmatprep.subr.mxu0 0.0
    %923 = vmatpush1.msra.mxu0 0.0
    %924 = vmatprep.subr.mxu0 0.0
    %925 = vmatpush1.msra.mxu0 0.0
    %926 = vmatprep.subr.mxu0 0.0
    %927 = vmatpush1.msra.mxu0 0.0
    %928 = vmatprep.subr.mxu0 0.0
    %929 = vmatpush1.msra.mxu0 0.0
    %930 = vmatprep.subr.mxu0 0.0
    %931 = vmatpush1.msra.mxu0 0.0
    %932 = vmatprep.subr.mxu0 0.0
    %933 = vmatpush1.msra.mxu0 0.0
    %934 = vmatprep.subr.mxu0 0.0
    %935 = vmatpush1.msra.mxu0 0.0
    %936 = vmatprep.subr.mxu0 0.0
    %937 = vmatpush1.msra.mxu0 0.0
    %938 = vmatprep.mubr.f32.mxu0 0.0
    %v939 = vand.u32 %v484, 4294901760
    %940 = vmatmul.mubr.f32.gmra.mrb[0].mxu0 %v939
    %v941 = vpop.f32.mrb[0].mxu0
    %v942 = vadd.f32 %v869, %v941
    %v943 = vpop.f32.mrb[0].mxu0
    %944 = vdwg.mxu0
    %v945 = vlaneseq
    %v946 = vshrl.u32 %v945, 7
    %v947 = vsub.s32 0, %v946
    %v948 = vrot.slane %v23, %v947
    %v949 = vadd.f32 %v942, %v948
    %v950 = vmax.f32 %v949, 0.0
    %v951 = vlaneseq
    %v952 = vshrl.u32 %v951, 7
    %v953 = vsub.s32 0, %v952
    %v954 = vrot.slane %v24, %v953
    %vm955 = vcmask 261120
    %v957 = vsel %vm955, %v950, 0
    %959 = vmatprep.subr.mxu0 0.0
    %v960 = vand.u32 %v18, 4294901760
    %961 = vmatpush1.msra.mxu0 %v960
    %962 = vmatprep.subr.mxu0 0.0
    %v963 = vand.u32 %v19, 4294901760
    %964 = vmatpush1.msra.mxu0 %v963
    %965 = vmatprep.subr.mxu0 0.0
    %v966 = vand.u32 %v20, 4294901760
    %967 = vmatpush1.msra.mxu0 %v966
    %968 = vmatprep.subr.mxu0 0.0
    %v969 = vand.u32 %v21, 4294901760
    %970 = vmatpush1.msra.mxu0 %v969
    %971 = vmatprep.subr.mxu0 0.0
    %972 = vmatpush1.msra.mxu0 0.0
    %973 = vmatprep.subr.mxu0 0.0
    %974 = vmatpush1.msra.mxu0 0.0
    %975 = vmatprep.subr.mxu0 0.0
    %976 = vmatpush1.msra.mxu0 0.0
    %977 = vmatprep.subr.mxu0 0.0
    %978 = vmatpush1.msra.mxu0 0.0
    %979 = vmatprep.subr.mxu0 0.0
    %980 = vmatpush1.msra.mxu0 0.0
    %981 = vmatprep.subr.mxu0 0.0
    %982 = vmatpush1.msra.mxu0 0.0
    %983 = vmatprep.subr.mxu0 0.0
    %984 = vmatpush1.msra.mxu0 0.0
    %985 = vmatprep.subr.mxu0 0.0
    %986 = vmatpush1.msra.mxu0 0.0
    %987 = vmatprep.subr.mxu0 0.0
    %988 = vmatpush1.msra.mxu0 0.0
    %989 = vmatprep.subr.mxu0 0.0
    %990 = vmatpush1.msra.mxu0 0.0
    %991 = vmatprep.subr.mxu0 0.0
    %992 = vmatpush1.msra.mxu0 0.0
    %993 = vmatprep.subr.mxu0 0.0
    %994 = vmatpush1.msra.mxu0 0.0
    %995 = vmatprep.subr.mxu0 0.0
    %996 = vmatpush1.msra.mxu0 0.0
    %997 = vmatprep.subr.mxu0 0.0
    %998 = vmatpush1.msra.mxu0 0.0
    %999 = vmatprep.subr.mxu0 0.0
    %1000 = vmatpush1.msra.mxu0 0.0
    %1001 = vmatprep.subr.mxu0 0.0
    %1002 = vmatpush1.msra.mxu0 0.0
    %1003 = vmatprep.subr.mxu0 0.0
    %1004 = vmatpush1.msra.mxu0 0.0
    %1005 = vmatprep.subr.mxu0 0.0
    %1006 = vmatpush1.msra.mxu0 0.0
    %1007 = vmatprep.subr.mxu0 0.0
    %1008 = vmatpush1.msra.mxu0 0.0
    %1009 = vmatprep.subr.mxu0 0.0
    %1010 = vmatpush1.msra.mxu0 0.0
    %1011 = vmatprep.subr.mxu0 0.0
    %1012 = vmatpush1.msra.mxu0 0.0
    %1013 = vmatprep.subr.mxu0 0.0
    %1014 = vmatpush1.msra.mxu0 0.0
    %1015 = vmatprep.subr.mxu0 0.0
    %1016 = vmatpush1.msra.mxu0 0.0
    %1017 = vmatprep.subr.mxu0 0.0
    %1018 = vmatpush1.msra.mxu0 0.0
    %1019 = vmatprep.subr.mxu0 0.0
    %1020 = vmatpush1.msra.mxu0 0.0
    %1021 = vmatprep.subr.mxu0 0.0
    %1022 = vmatpush1.msra.mxu0 0.0
    %1023 = vmatprep.subr.mxu0 0.0
    %1024 = vmatpush1.msra.mxu0 0.0
    %1025 = vmatprep.subr.mxu0 0.0
    %1026 = vmatpush1.msra.mxu0 0.0
    %1027 = vmatprep.mubr.f32.mxu0 0.0
    %v1028 = vand.u32 %v957, 4294901760
    %v1029 = vsub.f32 %v957, %v1028
    %v1030 = vand.u32 %v1029, 4294901760
    %v1031 = vsub.f32 %v1029, %v1030
    %v1032 = vand.u32 %v1031, 4294901760
    %1033 = vmatmul.mubr.f32.gmra.mrb[0].mxu0 %v1032
    %v1034 = vpop.f32.mrb[0].mxu0
    %v1035 = vadd.f32 %v954, %v1034
    %v1036 = vpop.f32.mrb[0].mxu0
    %1037 = vdwg.mxu0
    %1038 = vmatprep.subr.mxu0 0.0
    %v1039 = vand.u32 %v18, 4294901760
    %v1040 = vsub.f32 %v18, %v1039
    %v1041 = vand.u32 %v1040, 4294901760
    %v1042 = vsub.f32 %v1040, %v1041
    %v1043 = vand.u32 %v1042, 4294901760
    %1044 = vmatpush1.msra.mxu0 %v1043
    %1045 = vmatprep.subr.mxu0 0.0
    %v1046 = vand.u32 %v19, 4294901760
    %v1047 = vsub.f32 %v19, %v1046
    %v1048 = vand.u32 %v1047, 4294901760
    %v1049 = vsub.f32 %v1047, %v1048
    %v1050 = vand.u32 %v1049, 4294901760
    %1051 = vmatpush1.msra.mxu0 %v1050
    %1052 = vmatprep.subr.mxu0 0.0
    %v1053 = vand.u32 %v20, 4294901760
    %v1054 = vsub.f32 %v20, %v1053
    %v1055 = vand.u32 %v1054, 4294901760
    %v1056 = vsub.f32 %v1054, %v1055
    %v1057 = vand.u32 %v1056, 4294901760
    %1058 = vmatpush1.msra.mxu0 %v1057
    %1059 = vmatprep.subr.mxu0 0.0
    %v1060 = vand.u32 %v21, 4294901760
    %v1061 = vsub.f32 %v21, %v1060
    %v1062 = vand.u32 %v1061, 4294901760
    %v1063 = vsub.f32 %v1061, %v1062
    %v1064 = vand.u32 %v1063, 4294901760
    %1065 = vmatpush1.msra.mxu0 %v1064
    %1066 = vmatprep.subr.mxu0 0.0
    %1067 = vmatpush1.msra.mxu0 0.0
    %1068 = vmatprep.subr.mxu0 0.0
    %1069 = vmatpush1.msra.mxu0 0.0
    %1070 = vmatprep.subr.mxu0 0.0
    %1071 = vmatpush1.msra.mxu0 0.0
    %1072 = vmatprep.subr.mxu0 0.0
    %1073 = vmatpush1.msra.mxu0 0.0
    %1074 = vmatprep.subr.mxu0 0.0
    %1075 = vmatpush1.msra.mxu0 0.0
    %1076 = vmatprep.subr.mxu0 0.0
    %1077 = vmatpush1.msra.mxu0 0.0
    %1078 = vmatprep.subr.mxu0 0.0
    %1079 = vmatpush1.msra.mxu0 0.0
    %1080 = vmatprep.subr.mxu0 0.0
    %1081 = vmatpush1.msra.mxu0 0.0
    %1082 = vmatprep.subr.mxu0 0.0
    %1083 = vmatpush1.msra.mxu0 0.0
    %1084 = vmatprep.subr.mxu0 0.0
    %1085 = vmatpush1.msra.mxu0 0.0
    %1086 = vmatprep.subr.mxu0 0.0
    %1087 = vmatpush1.msra.mxu0 0.0
    %1088 = vmatprep.subr.mxu0 0.0
    %1089 = vmatpush1.msra.mxu0 0.0
    %1090 = vmatprep.subr.mxu0 0.0
    %1091 = vmatpush1.msra.mxu0 0.0
    %1092 = vmatprep.subr.mxu0 0.0
    %1093 = vmatpush1.msra.mxu0 0.0
    %1094 = vmatprep.subr.mxu0 0.0
    %1095 = vmatpush1.msra.mxu0 0.0
    %1096 = vmatprep.subr.mxu0 0.0
    %1097 = vmatpush1.msra.mxu0 0.0
    %1098 = vmatprep.subr.mxu0 0.0
    %1099 = vmatpush1.msra.mxu0 0.0
    %1100 = vmatprep.subr.mxu0 0.0
    %1101 = vmatpush1.msra.mxu0 0.0
    %1102 = vmatprep.subr.mxu0 0.0
    %1103 = vmatpush1.msra.mxu0 0.0
    %1104 = vmatprep.subr.mxu0 0.0
    %1105 = vmatpush1.msra.mxu0 0.0
    %1106 = vmatprep.subr.mxu0 0.0
    %1107 = vmatpush1.msra.mxu0 0.0
    %1108 = vmatprep.subr.mxu0 0.0
    %1109 = vmatpush1.msra.mxu0 0.0
    %1110 = vmatprep.subr.mxu0 0.0
    %1111 = vmatpush1.msra.mxu0 0.0
    %1112 = vmatprep.subr.mxu0 0.0
    %1113 = vmatpush1.msra.mxu0 0.0
    %1114 = vmatprep.subr.mxu0 0.0
    %1115 = vmatpush1.msra.mxu0 0.0
    %1116 = vmatprep.subr.mxu0 0.0
    %1117 = vmatpush1.msra.mxu0 0.0
    %1118 = vmatprep.subr.mxu0 0.0
    %1119 = vmatpush1.msra.mxu0 0.0
    %1120 = vmatprep.subr.mxu0 0.0
    %1121 = vmatpush1.msra.mxu0 0.0
    %1122 = vmatprep.mubr.f32.mxu0 0.0
    %v1123 = vand.u32 %v957, 4294901760
    %1124 = vmatmul.mubr.f32.gmra.mrb[0].mxu0 %v1123
    %v1125 = vpop.f32.mrb[0].mxu0
    %v1126 = vadd.f32 %v1035, %v1125
    %v1127 = vpop.f32.mrb[0].mxu0
    %1128 = vdwg.mxu0
    %1129 = vmatprep.subr.mxu0 0.0
    %v1130 = vand.u32 %v18, 4294901760
    %v1131 = vsub.f32 %v18, %v1130
    %1132 = vmatpush1.msra.mxu0 %v1131
    %1133 = vmatprep.subr.mxu0 0.0
    %v1134 = vand.u32 %v19, 4294901760
    %v1135 = vsub.f32 %v19, %v1134
    %1136 = vmatpush1.msra.mxu0 %v1135
    %1137 = vmatprep.subr.mxu0 0.0
    %v1138 = vand.u32 %v20, 4294901760
    %v1139 = vsub.f32 %v20, %v1138
    %1140 = vmatpush1.msra.mxu0 %v1139
    %1141 = vmatprep.subr.mxu0 0.0
    %v1142 = vand.u32 %v21, 4294901760
    %v1143 = vsub.f32 %v21, %v1142
    %1144 = vmatpush1.msra.mxu0 %v1143
    %1145 = vmatprep.subr.mxu0 0.0
    %1146 = vmatpush1.msra.mxu0 0.0
    %1147 = vmatprep.subr.mxu0 0.0
    %1148 = vmatpush1.msra.mxu0 0.0
    %1149 = vmatprep.subr.mxu0 0.0
    %1150 = vmatpush1.msra.mxu0 0.0
    %1151 = vmatprep.subr.mxu0 0.0
    %1152 = vmatpush1.msra.mxu0 0.0
    %1153 = vmatprep.subr.mxu0 0.0
    %1154 = vmatpush1.msra.mxu0 0.0
    %1155 = vmatprep.subr.mxu0 0.0
    %1156 = vmatpush1.msra.mxu0 0.0
    %1157 = vmatprep.subr.mxu0 0.0
    %1158 = vmatpush1.msra.mxu0 0.0
    %1159 = vmatprep.subr.mxu0 0.0
    %1160 = vmatpush1.msra.mxu0 0.0
    %1161 = vmatprep.subr.mxu0 0.0
    %1162 = vmatpush1.msra.mxu0 0.0
    %1163 = vmatprep.subr.mxu0 0.0
    %1164 = vmatpush1.msra.mxu0 0.0
    %1165 = vmatprep.subr.mxu0 0.0
    %1166 = vmatpush1.msra.mxu0 0.0
    %1167 = vmatprep.subr.mxu0 0.0
    %1168 = vmatpush1.msra.mxu0 0.0
    %1169 = vmatprep.subr.mxu0 0.0
    %1170 = vmatpush1.msra.mxu0 0.0
    %1171 = vmatprep.subr.mxu0 0.0
    %1172 = vmatpush1.msra.mxu0 0.0
    %1173 = vmatprep.subr.mxu0 0.0
    %1174 = vmatpush1.msra.mxu0 0.0
    %1175 = vmatprep.subr.mxu0 0.0
    %1176 = vmatpush1.msra.mxu0 0.0
    %1177 = vmatprep.subr.mxu0 0.0
    %1178 = vmatpush1.msra.mxu0 0.0
    %1179 = vmatprep.subr.mxu0 0.0
    %1180 = vmatpush1.msra.mxu0 0.0
    %1181 = vmatprep.subr.mxu0 0.0
    %1182 = vmatpush1.msra.mxu0 0.0
    %1183 = vmatprep.subr.mxu0 0.0
    %1184 = vmatpush1.msra.mxu0 0.0
    %1185 = vmatprep.subr.mxu0 0.0
    %1186 = vmatpush1.msra.mxu0 0.0
    %1187 = vmatprep.subr.mxu0 0.0
    %1188 = vmatpush1.msra.mxu0 0.0
    %1189 = vmatprep.subr.mxu0 0.0
    %1190 = vmatpush1.msra.mxu0 0.0
    %1191 = vmatprep.subr.mxu0 0.0
    %1192 = vmatpush1.msra.mxu0 0.0
    %1193 = vmatprep.subr.mxu0 0.0
    %1194 = vmatpush1.msra.mxu0 0.0
    %1195 = vmatprep.subr.mxu0 0.0
    %1196 = vmatpush1.msra.mxu0 0.0
    %1197 = vmatprep.subr.mxu0 0.0
    %1198 = vmatpush1.msra.mxu0 0.0
    %1199 = vmatprep.subr.mxu0 0.0
    %1200 = vmatpush1.msra.mxu0 0.0
    %1201 = vmatprep.mubr.f32.mxu0 0.0
    %v1202 = vand.u32 %v957, 4294901760
    %v1203 = vsub.f32 %v957, %v1202
    %1204 = vmatmul.mubr.f32.gmra.mrb[0].mxu0 %v1203
    %v1205 = vpop.f32.mrb[0].mxu0
    %v1206 = vadd.f32 %v1126, %v1205
    %v1207 = vpop.f32.mrb[0].mxu0
    %1208 = vdwg.mxu0
    %1209 = vmatprep.subr.mxu0 0.0
    %v1210 = vand.u32 %v18, 4294901760
    %1211 = vmatpush1.msra.mxu0 %v1210
    %1212 = vmatprep.subr.mxu0 0.0
    %v1213 = vand.u32 %v19, 4294901760
    %1214 = vmatpush1.msra.mxu0 %v1213
    %1215 = vmatprep.subr.mxu0 0.0
    %v1216 = vand.u32 %v20, 4294901760
    %1217 = vmatpush1.msra.mxu0 %v1216
    %1218 = vmatprep.subr.mxu0 0.0
    %v1219 = vand.u32 %v21, 4294901760
    %1220 = vmatpush1.msra.mxu0 %v1219
    %1221 = vmatprep.subr.mxu0 0.0
    %1222 = vmatpush1.msra.mxu0 0.0
    %1223 = vmatprep.subr.mxu0 0.0
    %1224 = vmatpush1.msra.mxu0 0.0
    %1225 = vmatprep.subr.mxu0 0.0
    %1226 = vmatpush1.msra.mxu0 0.0
    %1227 = vmatprep.subr.mxu0 0.0
    %1228 = vmatpush1.msra.mxu0 0.0
    %1229 = vmatprep.subr.mxu0 0.0
    %1230 = vmatpush1.msra.mxu0 0.0
    %1231 = vmatprep.subr.mxu0 0.0
    %1232 = vmatpush1.msra.mxu0 0.0
    %1233 = vmatprep.subr.mxu0 0.0
    %1234 = vmatpush1.msra.mxu0 0.0
    %1235 = vmatprep.subr.mxu0 0.0
    %1236 = vmatpush1.msra.mxu0 0.0
    %1237 = vmatprep.subr.mxu0 0.0
    %1238 = vmatpush1.msra.mxu0 0.0
    %1239 = vmatprep.subr.mxu0 0.0
    %1240 = vmatpush1.msra.mxu0 0.0
    %1241 = vmatprep.subr.mxu0 0.0
    %1242 = vmatpush1.msra.mxu0 0.0
    %1243 = vmatprep.subr.mxu0 0.0
    %1244 = vmatpush1.msra.mxu0 0.0
    %1245 = vmatprep.subr.mxu0 0.0
    %1246 = vmatpush1.msra.mxu0 0.0
    %1247 = vmatprep.subr.mxu0 0.0
    %1248 = vmatpush1.msra.mxu0 0.0
    %1249 = vmatprep.subr.mxu0 0.0
    %1250 = vmatpush1.msra.mxu0 0.0
    %1251 = vmatprep.subr.mxu0 0.0
    %1252 = vmatpush1.msra.mxu0 0.0
    %1253 = vmatprep.subr.mxu0 0.0
    %1254 = vmatpush1.msra.mxu0 0.0
    %1255 = vmatprep.subr.mxu0 0.0
    %1256 = vmatpush1.msra.mxu0 0.0
    %1257 = vmatprep.subr.mxu0 0.0
    %1258 = vmatpush1.msra.mxu0 0.0
    %1259 = vmatprep.subr.mxu0 0.0
    %1260 = vmatpush1.msra.mxu0 0.0
    %1261 = vmatprep.subr.mxu0 0.0
    %1262 = vmatpush1.msra.mxu0 0.0
    %1263 = vmatprep.subr.mxu0 0.0
    %1264 = vmatpush1.msra.mxu0 0.0
    %1265 = vmatprep.subr.mxu0 0.0
    %1266 = vmatpush1.msra.mxu0 0.0
    %1267 = vmatprep.subr.mxu0 0.0
    %1268 = vmatpush1.msra.mxu0 0.0
    %1269 = vmatprep.subr.mxu0 0.0
    %1270 = vmatpush1.msra.mxu0 0.0
    %1271 = vmatprep.subr.mxu0 0.0
    %1272 = vmatpush1.msra.mxu0 0.0
    %1273 = vmatprep.subr.mxu0 0.0
    %1274 = vmatpush1.msra.mxu0 0.0
    %1275 = vmatprep.subr.mxu0 0.0
    %1276 = vmatpush1.msra.mxu0 0.0
    %1277 = vmatprep.mubr.f32.mxu0 0.0
    %v1278 = vand.u32 %v957, 4294901760
    %v1279 = vsub.f32 %v957, %v1278
    %v1280 = vand.u32 %v1279, 4294901760
    %1281 = vmatmul.mubr.f32.gmra.mrb[0].mxu0 %v1280
    %v1282 = vpop.f32.mrb[0].mxu0
    %v1283 = vadd.f32 %v1206, %v1282
    %v1284 = vpop.f32.mrb[0].mxu0
    %1285 = vdwg.mxu0
    %1286 = vmatprep.subr.mxu0 0.0
    %v1287 = vand.u32 %v18, 4294901760
    %v1288 = vsub.f32 %v18, %v1287
    %v1289 = vand.u32 %v1288, 4294901760
    %1290 = vmatpush1.msra.mxu0 %v1289
    %1291 = vmatprep.subr.mxu0 0.0
    %v1292 = vand.u32 %v19, 4294901760
    %v1293 = vsub.f32 %v19, %v1292
    %v1294 = vand.u32 %v1293, 4294901760
    %1295 = vmatpush1.msra.mxu0 %v1294
    %1296 = vmatprep.subr.mxu0 0.0
    %v1297 = vand.u32 %v20, 4294901760
    %v1298 = vsub.f32 %v20, %v1297
    %v1299 = vand.u32 %v1298, 4294901760
    %1300 = vmatpush1.msra.mxu0 %v1299
    %1301 = vmatprep.subr.mxu0 0.0
    %v1302 = vand.u32 %v21, 4294901760
    %v1303 = vsub.f32 %v21, %v1302
    %v1304 = vand.u32 %v1303, 4294901760
    %1305 = vmatpush1.msra.mxu0 %v1304
    %1306 = vmatprep.subr.mxu0 0.0
    %1307 = vmatpush1.msra.mxu0 0.0
    %1308 = vmatprep.subr.mxu0 0.0
    %1309 = vmatpush1.msra.mxu0 0.0
    %1310 = vmatprep.subr.mxu0 0.0
    %1311 = vmatpush1.msra.mxu0 0.0
    %1312 = vmatprep.subr.mxu0 0.0
    %1313 = vmatpush1.msra.mxu0 0.0
    %1314 = vmatprep.subr.mxu0 0.0
    %1315 = vmatpush1.msra.mxu0 0.0
    %1316 = vmatprep.subr.mxu0 0.0
    %1317 = vmatpush1.msra.mxu0 0.0
    %1318 = vmatprep.subr.mxu0 0.0
    %1319 = vmatpush1.msra.mxu0 0.0
    %1320 = vmatprep.subr.mxu0 0.0
    %1321 = vmatpush1.msra.mxu0 0.0
    %1322 = vmatprep.subr.mxu0 0.0
    %1323 = vmatpush1.msra.mxu0 0.0
    %1324 = vmatprep.subr.mxu0 0.0
    %1325 = vmatpush1.msra.mxu0 0.0
    %1326 = vmatprep.subr.mxu0 0.0
    %1327 = vmatpush1.msra.mxu0 0.0
    %1328 = vmatprep.subr.mxu0 0.0
    %1329 = vmatpush1.msra.mxu0 0.0
    %1330 = vmatprep.subr.mxu0 0.0
    %1331 = vmatpush1.msra.mxu0 0.0
    %1332 = vmatprep.subr.mxu0 0.0
    %1333 = vmatpush1.msra.mxu0 0.0
    %1334 = vmatprep.subr.mxu0 0.0
    %1335 = vmatpush1.msra.mxu0 0.0
    %1336 = vmatprep.subr.mxu0 0.0
    %1337 = vmatpush1.msra.mxu0 0.0
    %1338 = vmatprep.subr.mxu0 0.0
    %1339 = vmatpush1.msra.mxu0 0.0
    %1340 = vmatprep.subr.mxu0 0.0
    %1341 = vmatpush1.msra.mxu0 0.0
    %1342 = vmatprep.subr.mxu0 0.0
    %1343 = vmatpush1.msra.mxu0 0.0
    %1344 = vmatprep.subr.mxu0 0.0
    %1345 = vmatpush1.msra.mxu0 0.0
    %1346 = vmatprep.subr.mxu0 0.0
    %1347 = vmatpush1.msra.mxu0 0.0
    %1348 = vmatprep.subr.mxu0 0.0
    %1349 = vmatpush1.msra.mxu0 0.0
    %1350 = vmatprep.subr.mxu0 0.0
    %1351 = vmatpush1.msra.mxu0 0.0
    %1352 = vmatprep.subr.mxu0 0.0
    %1353 = vmatpush1.msra.mxu0 0.0
    %1354 = vmatprep.subr.mxu0 0.0
    %1355 = vmatpush1.msra.mxu0 0.0
    %1356 = vmatprep.subr.mxu0 0.0
    %1357 = vmatpush1.msra.mxu0 0.0
    %1358 = vmatprep.subr.mxu0 0.0
    %1359 = vmatpush1.msra.mxu0 0.0
    %1360 = vmatprep.subr.mxu0 0.0
    %1361 = vmatpush1.msra.mxu0 0.0
    %1362 = vmatprep.mubr.f32.mxu0 0.0
    %v1363 = vand.u32 %v957, 4294901760
    %1364 = vmatmul.mubr.f32.gmra.mrb[0].mxu0 %v1363
    %v1365 = vpop.f32.mrb[0].mxu0
    %v1366 = vadd.f32 %v1283, %v1365
    %v1367 = vpop.f32.mrb[0].mxu0
    %1368 = vdwg.mxu0
    %1369 = vmatprep.subr.mxu0 0.0
    %v1370 = vand.u32 %v18, 4294901760
    %1371 = vmatpush1.msra.mxu0 %v1370
    %1372 = vmatprep.subr.mxu0 0.0
    %v1373 = vand.u32 %v19, 4294901760
    %1374 = vmatpush1.msra.mxu0 %v1373
    %1375 = vmatprep.subr.mxu0 0.0
    %v1376 = vand.u32 %v20, 4294901760
    %1377 = vmatpush1.msra.mxu0 %v1376
    %1378 = vmatprep.subr.mxu0 0.0
    %v1379 = vand.u32 %v21, 4294901760
    %1380 = vmatpush1.msra.mxu0 %v1379
    %1381 = vmatprep.subr.mxu0 0.0
    %1382 = vmatpush1.msra.mxu0 0.0
    %1383 = vmatprep.subr.mxu0 0.0
    %1384 = vmatpush1.msra.mxu0 0.0
    %1385 = vmatprep.subr.mxu0 0.0
    %1386 = vmatpush1.msra.mxu0 0.0
    %1387 = vmatprep.subr.mxu0 0.0
    %1388 = vmatpush1.msra.mxu0 0.0
    %1389 = vmatprep.subr.mxu0 0.0
    %1390 = vmatpush1.msra.mxu0 0.0
    %1391 = vmatprep.subr.mxu0 0.0
    %1392 = vmatpush1.msra.mxu0 0.0
    %1393 = vmatprep.subr.mxu0 0.0
    %1394 = vmatpush1.msra.mxu0 0.0
    %1395 = vmatprep.subr.mxu0 0.0
    %1396 = vmatpush1.msra.mxu0 0.0
    %1397 = vmatprep.subr.mxu0 0.0
    %1398 = vmatpush1.msra.mxu0 0.0
    %1399 = vmatprep.subr.mxu0 0.0
    %1400 = vmatpush1.msra.mxu0 0.0
    %1401 = vmatprep.subr.mxu0 0.0
    %1402 = vmatpush1.msra.mxu0 0.0
    %1403 = vmatprep.subr.mxu0 0.0
    %1404 = vmatpush1.msra.mxu0 0.0
    %1405 = vmatprep.subr.mxu0 0.0
    %1406 = vmatpush1.msra.mxu0 0.0
    %1407 = vmatprep.subr.mxu0 0.0
    %1408 = vmatpush1.msra.mxu0 0.0
    %1409 = vmatprep.subr.mxu0 0.0
    %1410 = vmatpush1.msra.mxu0 0.0
    %1411 = vmatprep.subr.mxu0 0.0
    %1412 = vmatpush1.msra.mxu0 0.0
    %1413 = vmatprep.subr.mxu0 0.0
    %1414 = vmatpush1.msra.mxu0 0.0
    %1415 = vmatprep.subr.mxu0 0.0
    %1416 = vmatpush1.msra.mxu0 0.0
    %1417 = vmatprep.subr.mxu0 0.0
    %1418 = vmatpush1.msra.mxu0 0.0
    %1419 = vmatprep.subr.mxu0 0.0
    %1420 = vmatpush1.msra.mxu0 0.0
    %1421 = vmatprep.subr.mxu0 0.0
    %1422 = vmatpush1.msra.mxu0 0.0
    %1423 = vmatprep.subr.mxu0 0.0
    %1424 = vmatpush1.msra.mxu0 0.0
    %1425 = vmatprep.subr.mxu0 0.0
    %1426 = vmatpush1.msra.mxu0 0.0
    %1427 = vmatprep.subr.mxu0 0.0
    %1428 = vmatpush1.msra.mxu0 0.0
    %1429 = vmatprep.subr.mxu0 0.0
    %1430 = vmatpush1.msra.mxu0 0.0
    %1431 = vmatprep.subr.mxu0 0.0
    %1432 = vmatpush1.msra.mxu0 0.0
    %1433 = vmatprep.subr.mxu0 0.0
    %1434 = vmatpush1.msra.mxu0 0.0
    %1435 = vmatprep.subr.mxu0 0.0
    %1436 = vmatpush1.msra.mxu0 0.0
    %1437 = vmatprep.mubr.f32.mxu0 0.0
    %v1438 = vand.u32 %v957, 4294901760
    %1439 = vmatmul.mubr.f32.gmra.mrb[0].mxu0 %v1438
    %v1440 = vpop.f32.mrb[0].mxu0
    %v1441 = vadd.f32 %v1366, %v1440
    %v1442 = vpop.f32.mrb[0].mxu0
    %1443 = vdwg.mxu0
    %v1444 = vmax.f32 %v1441, 0.0
    %1446 = vset.pattern.permute.xlu0 0
    %1447 = vperm.xlu0 %1446, %v25
    %v1448 = vpop.permute.xlu0 %1447
    %v1451 = vsel %vm955, %v22, 0
    %v1454 = vsel %vm955, %v1444, 0
    %1456 = vmatprep.subr.mxu0 0.0
    %v1457 = vand.u32 %v1454, 4294901760
    %1458 = vmatpush1.xpose.msra.mxu0 %v1457
    %1459 = vmatprep.subr.mxu0 0.0
    %1460 = vmatpush1.xpose.msra.mxu0 0.0
    %1461 = vmatprep.subr.mxu0 0.0
    %1462 = vmatpush1.xpose.msra.mxu0 0.0
    %1463 = vmatprep.subr.mxu0 0.0
    %1464 = vmatpush1.xpose.msra.mxu0 0.0
    %1465 = vmatprep.subr.mxu0 0.0
    %1466 = vmatpush1.xpose.msra.mxu0 0.0
    %1467 = vmatprep.subr.mxu0 0.0
    %1468 = vmatpush1.xpose.msra.mxu0 0.0
    %1469 = vmatprep.subr.mxu0 0.0
    %1470 = vmatpush1.xpose.msra.mxu0 0.0
    %1471 = vmatprep.subr.mxu0 0.0
    %1472 = vmatpush1.xpose.msra.mxu0 0.0
    %1473 = vmatprep.subr.mxu0 0.0
    %1474 = vmatpush1.xpose.msra.mxu0 0.0
    %1475 = vmatprep.subr.mxu0 0.0
    %1476 = vmatpush1.xpose.msra.mxu0 0.0
    %1477 = vmatprep.subr.mxu0 0.0
    %1478 = vmatpush1.xpose.msra.mxu0 0.0
    %1479 = vmatprep.subr.mxu0 0.0
    %1480 = vmatpush1.xpose.msra.mxu0 0.0
    %1481 = vmatprep.subr.mxu0 0.0
    %1482 = vmatpush1.xpose.msra.mxu0 0.0
    %1483 = vmatprep.subr.mxu0 0.0
    %1484 = vmatpush1.xpose.msra.mxu0 0.0
    %1485 = vmatprep.subr.mxu0 0.0
    %1486 = vmatpush1.xpose.msra.mxu0 0.0
    %1487 = vmatprep.subr.mxu0 0.0
    %1488 = vmatpush1.xpose.msra.mxu0 0.0
    %1489 = vmatprep.subr.mxu0 0.0
    %1490 = vmatpush1.xpose.msra.mxu0 0.0
    %1491 = vmatprep.subr.mxu0 0.0
    %1492 = vmatpush1.xpose.msra.mxu0 0.0
    %1493 = vmatprep.subr.mxu0 0.0
    %1494 = vmatpush1.xpose.msra.mxu0 0.0
    %1495 = vmatprep.subr.mxu0 0.0
    %1496 = vmatpush1.xpose.msra.mxu0 0.0
    %1497 = vmatprep.subr.mxu0 0.0
    %1498 = vmatpush1.xpose.msra.mxu0 0.0
    %1499 = vmatprep.subr.mxu0 0.0
    %1500 = vmatpush1.xpose.msra.mxu0 0.0
    %1501 = vmatprep.subr.mxu0 0.0
    %1502 = vmatpush1.xpose.msra.mxu0 0.0
    %1503 = vmatprep.subr.mxu0 0.0
    %1504 = vmatpush1.xpose.msra.mxu0 0.0
    %1505 = vmatprep.subr.mxu0 0.0
    %1506 = vmatpush1.xpose.msra.mxu0 0.0
    %1507 = vmatprep.subr.mxu0 0.0
    %1508 = vmatpush1.xpose.msra.mxu0 0.0
    %1509 = vmatprep.subr.mxu0 0.0
    %1510 = vmatpush1.xpose.msra.mxu0 0.0
    %1511 = vmatprep.subr.mxu0 0.0
    %1512 = vmatpush1.xpose.msra.mxu0 0.0
    %1513 = vmatprep.subr.mxu0 0.0
    %1514 = vmatpush1.xpose.msra.mxu0 0.0
    %1515 = vmatprep.subr.mxu0 0.0
    %1516 = vmatpush1.xpose.msra.mxu0 0.0
    %1517 = vmatprep.subr.mxu0 0.0
    %1518 = vmatpush1.xpose.msra.mxu0 0.0
    %1519 = vmatprep.subr.mxu0 0.0
    %1520 = vmatpush1.xpose.msra.mxu0 0.0
    %1521 = vmatprep.mubr.f32.mxu0 0.0
    %v1522 = vand.u32 %v1451, 4294901760
    %v1523 = vsub.f32 %v1451, %v1522
    %v1524 = vand.u32 %v1523, 4294901760
    %v1525 = vsub.f32 %v1523, %v1524
    %v1526 = vand.u32 %v1525, 4294901760
    %1527 = vmatmul.mubr.f32.gmra.mrb[0].mxu0 %v1526
    %v1528 = vpop.f32.mrb[0].mxu0
    %v1529 = vadd.f32 %v1448, %v1528
    %v1530 = vpop.f32.mrb[0].mxu0
    %1531 = vdwg.mxu0
    %1532 = vmatprep.subr.mxu0 0.0
    %v1533 = vand.u32 %v1454, 4294901760
    %v1534 = vsub.f32 %v1454, %v1533
    %v1535 = vand.u32 %v1534, 4294901760
    %v1536 = vsub.f32 %v1534, %v1535
    %v1537 = vand.u32 %v1536, 4294901760
    %1538 = vmatpush1.xpose.msra.mxu0 %v1537
    %1539 = vmatprep.subr.mxu0 0.0
    %1540 = vmatpush1.xpose.msra.mxu0 0.0
    %1541 = vmatprep.subr.mxu0 0.0
    %1542 = vmatpush1.xpose.msra.mxu0 0.0
    %1543 = vmatprep.subr.mxu0 0.0
    %1544 = vmatpush1.xpose.msra.mxu0 0.0
    %1545 = vmatprep.subr.mxu0 0.0
    %1546 = vmatpush1.xpose.msra.mxu0 0.0
    %1547 = vmatprep.subr.mxu0 0.0
    %1548 = vmatpush1.xpose.msra.mxu0 0.0
    %1549 = vmatprep.subr.mxu0 0.0
    %1550 = vmatpush1.xpose.msra.mxu0 0.0
    %1551 = vmatprep.subr.mxu0 0.0
    %1552 = vmatpush1.xpose.msra.mxu0 0.0
    %1553 = vmatprep.subr.mxu0 0.0
    %1554 = vmatpush1.xpose.msra.mxu0 0.0
    %1555 = vmatprep.subr.mxu0 0.0
    %1556 = vmatpush1.xpose.msra.mxu0 0.0
    %1557 = vmatprep.subr.mxu0 0.0
    %1558 = vmatpush1.xpose.msra.mxu0 0.0
    %1559 = vmatprep.subr.mxu0 0.0
    %1560 = vmatpush1.xpose.msra.mxu0 0.0
    %1561 = vmatprep.subr.mxu0 0.0
    %1562 = vmatpush1.xpose.msra.mxu0 0.0
    %1563 = vmatprep.subr.mxu0 0.0
    %1564 = vmatpush1.xpose.msra.mxu0 0.0
    %1565 = vmatprep.subr.mxu0 0.0
    %1566 = vmatpush1.xpose.msra.mxu0 0.0
    %1567 = vmatprep.subr.mxu0 0.0
    %1568 = vmatpush1.xpose.msra.mxu0 0.0
    %1569 = vmatprep.subr.mxu0 0.0
    %1570 = vmatpush1.xpose.msra.mxu0 0.0
    %1571 = vmatprep.subr.mxu0 0.0
    %1572 = vmatpush1.xpose.msra.mxu0 0.0
    %1573 = vmatprep.subr.mxu0 0.0
    %1574 = vmatpush1.xpose.msra.mxu0 0.0
    %1575 = vmatprep.subr.mxu0 0.0
    %1576 = vmatpush1.xpose.msra.mxu0 0.0
    %1577 = vmatprep.subr.mxu0 0.0
    %1578 = vmatpush1.xpose.msra.mxu0 0.0
    %1579 = vmatprep.subr.mxu0 0.0
    %1580 = vmatpush1.xpose.msra.mxu0 0.0
    %1581 = vmatprep.subr.mxu0 0.0
    %1582 = vmatpush1.xpose.msra.mxu0 0.0
    %1583 = vmatprep.subr.mxu0 0.0
    %1584 = vmatpush1.xpose.msra.mxu0 0.0
    %1585 = vmatprep.subr.mxu0 0.0
    %1586 = vmatpush1.xpose.msra.mxu0 0.0
    %1587 = vmatprep.subr.mxu0 0.0
    %1588 = vmatpush1.xpose.msra.mxu0 0.0
    %1589 = vmatprep.subr.mxu0 0.0
    %1590 = vmatpush1.xpose.msra.mxu0 0.0
    %1591 = vmatprep.subr.mxu0 0.0
    %1592 = vmatpush1.xpose.msra.mxu0 0.0
    %1593 = vmatprep.subr.mxu0 0.0
    %1594 = vmatpush1.xpose.msra.mxu0 0.0
    %1595 = vmatprep.subr.mxu0 0.0
    %1596 = vmatpush1.xpose.msra.mxu0 0.0
    %1597 = vmatprep.subr.mxu0 0.0
    %1598 = vmatpush1.xpose.msra.mxu0 0.0
    %1599 = vmatprep.subr.mxu0 0.0
    %1600 = vmatpush1.xpose.msra.mxu0 0.0
    %1601 = vmatprep.mubr.f32.mxu0 0.0
    %v1602 = vand.u32 %v1451, 4294901760
    %1603 = vmatmul.mubr.f32.gmra.mrb[0].mxu0 %v1602
    %v1604 = vpop.f32.mrb[0].mxu0
    %v1605 = vadd.f32 %v1529, %v1604
    %v1606 = vpop.f32.mrb[0].mxu0
    %1607 = vdwg.mxu0
    %1608 = vmatprep.subr.mxu0 0.0
    %v1609 = vand.u32 %v1454, 4294901760
    %v1610 = vsub.f32 %v1454, %v1609
    %1611 = vmatpush1.xpose.msra.mxu0 %v1610
    %1612 = vmatprep.subr.mxu0 0.0
    %1613 = vmatpush1.xpose.msra.mxu0 0.0
    %1614 = vmatprep.subr.mxu0 0.0
    %1615 = vmatpush1.xpose.msra.mxu0 0.0
    %1616 = vmatprep.subr.mxu0 0.0
    %1617 = vmatpush1.xpose.msra.mxu0 0.0
    %1618 = vmatprep.subr.mxu0 0.0
    %1619 = vmatpush1.xpose.msra.mxu0 0.0
    %1620 = vmatprep.subr.mxu0 0.0
    %1621 = vmatpush1.xpose.msra.mxu0 0.0
    %1622 = vmatprep.subr.mxu0 0.0
    %1623 = vmatpush1.xpose.msra.mxu0 0.0
    %1624 = vmatprep.subr.mxu0 0.0
    %1625 = vmatpush1.xpose.msra.mxu0 0.0
    %1626 = vmatprep.subr.mxu0 0.0
    %1627 = vmatpush1.xpose.msra.mxu0 0.0
    %1628 = vmatprep.subr.mxu0 0.0
    %1629 = vmatpush1.xpose.msra.mxu0 0.0
    %1630 = vmatprep.subr.mxu0 0.0
    %1631 = vmatpush1.xpose.msra.mxu0 0.0
    %1632 = vmatprep.subr.mxu0 0.0
    %1633 = vmatpush1.xpose.msra.mxu0 0.0
    %1634 = vmatprep.subr.mxu0 0.0
    %1635 = vmatpush1.xpose.msra.mxu0 0.0
    %1636 = vmatprep.subr.mxu0 0.0
    %1637 = vmatpush1.xpose.msra.mxu0 0.0
    %1638 = vmatprep.subr.mxu0 0.0
    %1639 = vmatpush1.xpose.msra.mxu0 0.0
    %1640 = vmatprep.subr.mxu0 0.0
    %1641 = vmatpush1.xpose.msra.mxu0 0.0
    %1642 = vmatprep.subr.mxu0 0.0
    %1643 = vmatpush1.xpose.msra.mxu0 0.0
    %1644 = vmatprep.subr.mxu0 0.0
    %1645 = vmatpush1.xpose.msra.mxu0 0.0
    %1646 = vmatprep.subr.mxu0 0.0
    %1647 = vmatpush1.xpose.msra.mxu0 0.0
    %1648 = vmatprep.subr.mxu0 0.0
    %1649 = vmatpush1.xpose.msra.mxu0 0.0
    %1650 = vmatprep.subr.mxu0 0.0
    %1651 = vmatpush1.xpose.msra.mxu0 0.0
    %1652 = vmatprep.subr.mxu0 0.0
    %1653 = vmatpush1.xpose.msra.mxu0 0.0
    %1654 = vmatprep.subr.mxu0 0.0
    %1655 = vmatpush1.xpose.msra.mxu0 0.0
    %1656 = vmatprep.subr.mxu0 0.0
    %1657 = vmatpush1.xpose.msra.mxu0 0.0
    %1658 = vmatprep.subr.mxu0 0.0
    %1659 = vmatpush1.xpose.msra.mxu0 0.0
    %1660 = vmatprep.subr.mxu0 0.0
    %1661 = vmatpush1.xpose.msra.mxu0 0.0
    %1662 = vmatprep.subr.mxu0 0.0
    %1663 = vmatpush1.xpose.msra.mxu0 0.0
    %1664 = vmatprep.subr.mxu0 0.0
    %1665 = vmatpush1.xpose.msra.mxu0 0.0
    %1666 = vmatprep.subr.mxu0 0.0
    %1667 = vmatpush1.xpose.msra.mxu0 0.0
    %1668 = vmatprep.subr.mxu0 0.0
    %1669 = vmatpush1.xpose.msra.mxu0 0.0
    %1670 = vmatprep.subr.mxu0 0.0
    %1671 = vmatpush1.xpose.msra.mxu0 0.0
    %1672 = vmatprep.subr.mxu0 0.0
    %1673 = vmatpush1.xpose.msra.mxu0 0.0
    %1674 = vmatprep.mubr.f32.mxu0 0.0
    %v1675 = vand.u32 %v1451, 4294901760
    %v1676 = vsub.f32 %v1451, %v1675
    %1677 = vmatmul.mubr.f32.gmra.mrb[0].mxu0 %v1676
    %v1678 = vpop.f32.mrb[0].mxu0
    %v1679 = vadd.f32 %v1605, %v1678
    %v1680 = vpop.f32.mrb[0].mxu0
    %1681 = vdwg.mxu0
    %1682 = vmatprep.subr.mxu0 0.0
    %v1683 = vand.u32 %v1454, 4294901760
    %1684 = vmatpush1.xpose.msra.mxu0 %v1683
    %1685 = vmatprep.subr.mxu0 0.0
    %1686 = vmatpush1.xpose.msra.mxu0 0.0
    %1687 = vmatprep.subr.mxu0 0.0
    %1688 = vmatpush1.xpose.msra.mxu0 0.0
    %1689 = vmatprep.subr.mxu0 0.0
    %1690 = vmatpush1.xpose.msra.mxu0 0.0
    %1691 = vmatprep.subr.mxu0 0.0
    %1692 = vmatpush1.xpose.msra.mxu0 0.0
    %1693 = vmatprep.subr.mxu0 0.0
    %1694 = vmatpush1.xpose.msra.mxu0 0.0
    %1695 = vmatprep.subr.mxu0 0.0
    %1696 = vmatpush1.xpose.msra.mxu0 0.0
    %1697 = vmatprep.subr.mxu0 0.0
    %1698 = vmatpush1.xpose.msra.mxu0 0.0
    %1699 = vmatprep.subr.mxu0 0.0
    %1700 = vmatpush1.xpose.msra.mxu0 0.0
    %1701 = vmatprep.subr.mxu0 0.0
    %1702 = vmatpush1.xpose.msra.mxu0 0.0
    %1703 = vmatprep.subr.mxu0 0.0
    %1704 = vmatpush1.xpose.msra.mxu0 0.0
    %1705 = vmatprep.subr.mxu0 0.0
    %1706 = vmatpush1.xpose.msra.mxu0 0.0
    %1707 = vmatprep.subr.mxu0 0.0
    %1708 = vmatpush1.xpose.msra.mxu0 0.0
    %1709 = vmatprep.subr.mxu0 0.0
    %1710 = vmatpush1.xpose.msra.mxu0 0.0
    %1711 = vmatprep.subr.mxu0 0.0
    %1712 = vmatpush1.xpose.msra.mxu0 0.0
    %1713 = vmatprep.subr.mxu0 0.0
    %1714 = vmatpush1.xpose.msra.mxu0 0.0
    %1715 = vmatprep.subr.mxu0 0.0
    %1716 = vmatpush1.xpose.msra.mxu0 0.0
    %1717 = vmatprep.subr.mxu0 0.0
    %1718 = vmatpush1.xpose.msra.mxu0 0.0
    %1719 = vmatprep.subr.mxu0 0.0
    %1720 = vmatpush1.xpose.msra.mxu0 0.0
    %1721 = vmatprep.subr.mxu0 0.0
    %1722 = vmatpush1.xpose.msra.mxu0 0.0
    %1723 = vmatprep.subr.mxu0 0.0
    %1724 = vmatpush1.xpose.msra.mxu0 0.0
    %1725 = vmatprep.subr.mxu0 0.0
    %1726 = vmatpush1.xpose.msra.mxu0 0.0
    %1727 = vmatprep.subr.mxu0 0.0
    %1728 = vmatpush1.xpose.msra.mxu0 0.0
    %1729 = vmatprep.subr.mxu0 0.0
    %1730 = vmatpush1.xpose.msra.mxu0 0.0
    %1731 = vmatprep.subr.mxu0 0.0
    %1732 = vmatpush1.xpose.msra.mxu0 0.0
    %1733 = vmatprep.subr.mxu0 0.0
    %1734 = vmatpush1.xpose.msra.mxu0 0.0
    %1735 = vmatprep.subr.mxu0 0.0
    %1736 = vmatpush1.xpose.msra.mxu0 0.0
    %1737 = vmatprep.subr.mxu0 0.0
    %1738 = vmatpush1.xpose.msra.mxu0 0.0
    %1739 = vmatprep.subr.mxu0 0.0
    %1740 = vmatpush1.xpose.msra.mxu0 0.0
    %1741 = vmatprep.subr.mxu0 0.0
    %1742 = vmatpush1.xpose.msra.mxu0 0.0
    %1743 = vmatprep.subr.mxu0 0.0
    %1744 = vmatpush1.xpose.msra.mxu0 0.0
    %1745 = vmatprep.subr.mxu0 0.0
    %1746 = vmatpush1.xpose.msra.mxu0 0.0
    %1747 = vmatprep.mubr.f32.mxu0 0.0
    %v1748 = vand.u32 %v1451, 4294901760
    %v1749 = vsub.f32 %v1451, %v1748
    %v1750 = vand.u32 %v1749, 4294901760
    %1751 = vmatmul.mubr.f32.gmra.mrb[0].mxu0 %v1750
    %v1752 = vpop.f32.mrb[0].mxu0
    %v1753 = vadd.f32 %v1679, %v1752
    %v1754 = vpop.f32.mrb[0].mxu0
    %1755 = vdwg.mxu0
    %1756 = vmatprep.subr.mxu0 0.0
    %v1757 = vand.u32 %v1454, 4294901760
    %v1758 = vsub.f32 %v1454, %v1757
    %v1759 = vand.u32 %v1758, 4294901760
    %1760 = vmatpush1.xpose.msra.mxu0 %v1759
    %1761 = vmatprep.subr.mxu0 0.0
    %1762 = vmatpush1.xpose.msra.mxu0 0.0
    %1763 = vmatprep.subr.mxu0 0.0
    %1764 = vmatpush1.xpose.msra.mxu0 0.0
    %1765 = vmatprep.subr.mxu0 0.0
    %1766 = vmatpush1.xpose.msra.mxu0 0.0
    %1767 = vmatprep.subr.mxu0 0.0
    %1768 = vmatpush1.xpose.msra.mxu0 0.0
    %1769 = vmatprep.subr.mxu0 0.0
    %1770 = vmatpush1.xpose.msra.mxu0 0.0
    %1771 = vmatprep.subr.mxu0 0.0
    %1772 = vmatpush1.xpose.msra.mxu0 0.0
    %1773 = vmatprep.subr.mxu0 0.0
    %1774 = vmatpush1.xpose.msra.mxu0 0.0
    %1775 = vmatprep.subr.mxu0 0.0
    %1776 = vmatpush1.xpose.msra.mxu0 0.0
    %1777 = vmatprep.subr.mxu0 0.0
    %1778 = vmatpush1.xpose.msra.mxu0 0.0
    %1779 = vmatprep.subr.mxu0 0.0
    %1780 = vmatpush1.xpose.msra.mxu0 0.0
    %1781 = vmatprep.subr.mxu0 0.0
    %1782 = vmatpush1.xpose.msra.mxu0 0.0
    %1783 = vmatprep.subr.mxu0 0.0
    %1784 = vmatpush1.xpose.msra.mxu0 0.0
    %1785 = vmatprep.subr.mxu0 0.0
    %1786 = vmatpush1.xpose.msra.mxu0 0.0
    %1787 = vmatprep.subr.mxu0 0.0
    %1788 = vmatpush1.xpose.msra.mxu0 0.0
    %1789 = vmatprep.subr.mxu0 0.0
    %1790 = vmatpush1.xpose.msra.mxu0 0.0
    %1791 = vmatprep.subr.mxu0 0.0
    %1792 = vmatpush1.xpose.msra.mxu0 0.0
    %1793 = vmatprep.subr.mxu0 0.0
    %1794 = vmatpush1.xpose.msra.mxu0 0.0
    %1795 = vmatprep.subr.mxu0 0.0
    %1796 = vmatpush1.xpose.msra.mxu0 0.0
    %1797 = vmatprep.subr.mxu0 0.0
    %1798 = vmatpush1.xpose.msra.mxu0 0.0
    %1799 = vmatprep.subr.mxu0 0.0
    %1800 = vmatpush1.xpose.msra.mxu0 0.0
    %1801 = vmatprep.subr.mxu0 0.0
    %1802 = vmatpush1.xpose.msra.mxu0 0.0
    %1803 = vmatprep.subr.mxu0 0.0
    %1804 = vmatpush1.xpose.msra.mxu0 0.0
    %1805 = vmatprep.subr.mxu0 0.0
    %1806 = vmatpush1.xpose.msra.mxu0 0.0
    %1807 = vmatprep.subr.mxu0 0.0
    %1808 = vmatpush1.xpose.msra.mxu0 0.0
    %1809 = vmatprep.subr.mxu0 0.0
    %1810 = vmatpush1.xpose.msra.mxu0 0.0
    %1811 = vmatprep.subr.mxu0 0.0
    %1812 = vmatpush1.xpose.msra.mxu0 0.0
    %1813 = vmatprep.subr.mxu0 0.0
    %1814 = vmatpush1.xpose.msra.mxu0 0.0
    %1815 = vmatprep.subr.mxu0 0.0
    %1816 = vmatpush1.xpose.msra.mxu0 0.0
    %1817 = vmatprep.subr.mxu0 0.0
    %1818 = vmatpush1.xpose.msra.mxu0 0.0
    %1819 = vmatprep.subr.mxu0 0.0
    %1820 = vmatpush1.xpose.msra.mxu0 0.0
    %1821 = vmatprep.subr.mxu0 0.0
    %1822 = vmatpush1.xpose.msra.mxu0 0.0
    %1823 = vmatprep.mubr.f32.mxu0 0.0
    %v1824 = vand.u32 %v1451, 4294901760
    %1825 = vmatmul.mubr.f32.gmra.mrb[0].mxu0 %v1824
    %v1826 = vpop.f32.mrb[0].mxu0
    %v1827 = vadd.f32 %v1753, %v1826
    %v1828 = vpop.f32.mrb[0].mxu0
    %1829 = vdwg.mxu0
    %1830 = vmatprep.subr.mxu0 0.0
    %v1831 = vand.u32 %v1454, 4294901760
    %1832 = vmatpush1.xpose.msra.mxu0 %v1831
    %1833 = vmatprep.subr.mxu0 0.0
    %1834 = vmatpush1.xpose.msra.mxu0 0.0
    %1835 = vmatprep.subr.mxu0 0.0
    %1836 = vmatpush1.xpose.msra.mxu0 0.0
    %1837 = vmatprep.subr.mxu0 0.0
    %1838 = vmatpush1.xpose.msra.mxu0 0.0
    %1839 = vmatprep.subr.mxu0 0.0
    %1840 = vmatpush1.xpose.msra.mxu0 0.0
    %1841 = vmatprep.subr.mxu0 0.0
    %1842 = vmatpush1.xpose.msra.mxu0 0.0
    %1843 = vmatprep.subr.mxu0 0.0
    %1844 = vmatpush1.xpose.msra.mxu0 0.0
    %1845 = vmatprep.subr.mxu0 0.0
    %1846 = vmatpush1.xpose.msra.mxu0 0.0
    %1847 = vmatprep.subr.mxu0 0.0
    %1848 = vmatpush1.xpose.msra.mxu0 0.0
    %1849 = vmatprep.subr.mxu0 0.0
    %1850 = vmatpush1.xpose.msra.mxu0 0.0
    %1851 = vmatprep.subr.mxu0 0.0
    %1852 = vmatpush1.xpose.msra.mxu0 0.0
    %1853 = vmatprep.subr.mxu0 0.0
    %1854 = vmatpush1.xpose.msra.mxu0 0.0
    %1855 = vmatprep.subr.mxu0 0.0
    %1856 = vmatpush1.xpose.msra.mxu0 0.0
    %1857 = vmatprep.subr.mxu0 0.0
    %1858 = vmatpush1.xpose.msra.mxu0 0.0
    %1859 = vmatprep.subr.mxu0 0.0
    %1860 = vmatpush1.xpose.msra.mxu0 0.0
    %1861 = vmatprep.subr.mxu0 0.0
    %1862 = vmatpush1.xpose.msra.mxu0 0.0
    %1863 = vmatprep.subr.mxu0 0.0
    %1864 = vmatpush1.xpose.msra.mxu0 0.0
    %1865 = vmatprep.subr.mxu0 0.0
    %1866 = vmatpush1.xpose.msra.mxu0 0.0
    %1867 = vmatprep.subr.mxu0 0.0
    %1868 = vmatpush1.xpose.msra.mxu0 0.0
    %1869 = vmatprep.subr.mxu0 0.0
    %1870 = vmatpush1.xpose.msra.mxu0 0.0
    %1871 = vmatprep.subr.mxu0 0.0
    %1872 = vmatpush1.xpose.msra.mxu0 0.0
    %1873 = vmatprep.subr.mxu0 0.0
    %1874 = vmatpush1.xpose.msra.mxu0 0.0
    %1875 = vmatprep.subr.mxu0 0.0
    %1876 = vmatpush1.xpose.msra.mxu0 0.0
    %1877 = vmatprep.subr.mxu0 0.0
    %1878 = vmatpush1.xpose.msra.mxu0 0.0
    %1879 = vmatprep.subr.mxu0 0.0
    %1880 = vmatpush1.xpose.msra.mxu0 0.0
    %1881 = vmatprep.subr.mxu0 0.0
    %1882 = vmatpush1.xpose.msra.mxu0 0.0
    %1883 = vmatprep.subr.mxu0 0.0
    %1884 = vmatpush1.xpose.msra.mxu0 0.0
    %1885 = vmatprep.subr.mxu0 0.0
    %1886 = vmatpush1.xpose.msra.mxu0 0.0
    %1887 = vmatprep.subr.mxu0 0.0
    %1888 = vmatpush1.xpose.msra.mxu0 0.0
    %1889 = vmatprep.subr.mxu0 0.0
    %1890 = vmatpush1.xpose.msra.mxu0 0.0
    %1891 = vmatprep.subr.mxu0 0.0
    %1892 = vmatpush1.xpose.msra.mxu0 0.0
    %1893 = vmatprep.subr.mxu0 0.0
    %1894 = vmatpush1.xpose.msra.mxu0 0.0
    %1895 = vmatprep.mubr.f32.mxu0 0.0
    %v1896 = vand.u32 %v1451, 4294901760
    %1897 = vmatmul.mubr.f32.gmra.mrb[0].mxu0 %v1896
    %v1898 = vpop.f32.mrb[0].mxu0
    %v1899 = vadd.f32 %v1827, %v1898
    %v1900 = vpop.f32.mrb[0].mxu0
    %1901 = vdwg.mxu0
    %vm1902 = vcmask 57344
    %1903 = vst.msk [vmem:[#allocation2] sm:$0x1] %vm1902, %v1899
    // Predicated region
    $region14: #{tpu_custom_call.1} parent=1 // pred_check
      _
    $region15: #{tpu_custom_call.1} parent=1 // pred_check_branch
      %1905 = sbr.rel (0) target = $region17
    $region16: #{tpu_custom_call.1} parent=1 // pred_region
      %s1907 = ssub.s32 16, 16
      %1908 = vsyncadd [#allocation3], %s1907
      %s1910 = sshll.u32 [#allocation2], 4
      %s1911 = int_to_ptr.vmem [resolvable:$true] %s1910
      %1913 = dma.vmem_to_hbm [thread:$0]  %s1911, 16, %s3, [#allocation3]
    $region17: #{tpu_custom_call.1} parent=1 // pred_fallthru
      _
    // Predicated region
    $region18: #{tpu_custom_call.1} parent=1 // pred_check
      _
    $region19: #{tpu_custom_call.1} parent=1 // pred_check_branch
      %1915 = sbr.rel (0) target = $region21
    $region20: #{tpu_custom_call.1} parent=1 // pred_region
      %1916 = dma.done [#allocation3], 16
    $region21: #{tpu_custom_call.1} parent=1 // pred_fallthru
      _
    %1917 = vsyncpa [#allocation3], 1

</llo_original>
